<compile_context>
chip_gen: v7x
topology: tpu7x:2x2x1
jax: 0.10.0
libtpu: 0.0.40
codegen_flags: <defaults>
</compile_context>

<pallas_src>
import math

import numpy as np
import jax
import jax.numpy as jnp
from jax.experimental import pallas as pl
from jax.experimental.pallas import tpu as pltpu

K = 3  # every conv / deconv in the module is 3x3


# ----------------------------------------------------------------------------
# Static (numpy, host-side) tap-selection tensors:
#   T[q, k, p] = 1 iff flattened input position q feeds kernel tap k of
#   flattened output position p.  Padding taps simply have no 1s.
# ----------------------------------------------------------------------------
def _conv_out(h):            # Conv2d(k=3, stride=2, padding=1)
    return (h + 2 - K) // 2 + 1


def _deconv_out(h):          # ConvTranspose2d(k=3, stride=2, padding=1, output_padding=1)
    return (h - 1) * 2 - 2 + K + 1


def _conv_taps(H, W):
    Ho, Wo = _conv_out(H), _conv_out(W)
    T = np.zeros((H * W, K * K, Ho * Wo), np.float32)
    for oh in range(Ho):
        for ow in range(Wo):
            p = oh * Wo + ow
            for kh in range(K):
                for kw in range(K):
                    ih = oh * 2 - 1 + kh
                    iw = ow * 2 - 1 + kw
                    if 0 <= ih < H and 0 <= iw < W:
                        T[ih * W + iw, kh * K + kw, p] = 1.0
    return T, Ho, Wo


def _deconv_taps(H, W):
    Ho, Wo = _deconv_out(H), _deconv_out(W)
    T = np.zeros((H * W, K * K, Ho * Wo), np.float32)
    for ih in range(H):
        for iw in range(W):
            q = ih * W + iw
            for kh in range(K):
                for kw in range(K):
                    oh = ih * 2 - 1 + kh     # oh = ih*stride - padding + kh
                    ow = iw * 2 - 1 + kw
                    if 0 <= oh < Ho and 0 <= ow < Wo:
                        T[q, kh * K + kw, oh * Wo + ow] = 1.0
    return T, Ho, Wo


# ----------------------------------------------------------------------------
# ONE-TIME, host-side (numpy) folding of torch-layout weights into dense
# unrolled matrices:
#   Wu[q*Cin + ci, p*Cout + co] = sum_k T[q,k,p] * Wm[k,ci,co]
# Activation columns are (position-major, channel-minor); with Cin=Cout=1 at
# the boundaries this equals the plain NCHW flatten, so the wrapper needs no
# transposes.  Call this OUTSIDE the jitted forward and reuse the result.
# ----------------------------------------------------------------------------
def fold_params(p, H, W):
    Ws, bs = [], []

    def fold(T, Wm, b, HW, Cin, HoWo, Cout):
        Wu = np.einsum("qkp,kio->qipo", T, Wm).reshape(HW * Cin, HoWo * Cout)
        Ws.append(jnp.asarray(Wu, dtype=jnp.bfloat16))            # bf16 stream
        bs.append(jnp.asarray(np.tile(b, HoWo).reshape(1, HoWo * Cout),
                              dtype=jnp.float32))

    def add_conv(w, b, H, W):
        w = np.asarray(w); b = np.asarray(b)
        Cout, Cin, _, _ = w.shape
        T, Ho, Wo = _conv_taps(H, W)
        Wm = np.transpose(w, (2, 3, 1, 0)).reshape(K * K, Cin, Cout)
        fold(T, Wm, b, H * W, Cin, Ho * Wo, Cout)
        return Ho, Wo, Cout

    def add_deconv(w, b, H, W):
        w = np.asarray(w); b = np.asarray(b)
        Cin, Cout, _, _ = w.shape
        T, Ho, Wo = _deconv_taps(H, W)
        Wm = np.transpose(w, (2, 3, 0, 1)).reshape(K * K, Cin, Cout)
        fold(T, Wm, b, H * W, Cin, Ho * Wo, Cout)
        return Ho, Wo, Cout

    assert int(np.asarray(p["e1w"]).shape[1]) == 1, "layout baking assumes Cin=1"
    h, w = H, W
    h, w, _ = add_conv(p["e1w"], p["e1b"], h, w)
    h, w, _ = add_conv(p["e2w"], p["e2b"], h, w)
    h, w, _ = add_conv(p["e3w"], p["e3b"], h, w)
    h, w, _ = add_deconv(p["d1w"], p["d1b"], h, w)
    h, w, _ = add_deconv(p["d2w"], p["d2b"], h, w)
    h, w, c = add_deconv(p["d3w"], p["d3b"], h, w)
    assert c == 1, "layout baking assumes Cout=1"

    # VMEM scalability guard: whole-array weight residency only works while
    # the O((H*W)^2) unrolled footprint fits (v7x physical VMEM is 64 MiB,
    # default scoped limit is 32 MiB everywhere).
    weight_bytes = sum(int(np.prod(Wu.shape)) * 2 for Wu in Ws)   # bf16
    assert weight_bytes < 24 * 1024 * 1024, (
        "unrolled weights too large for whole-array VMEM residency; "
        "block the contraction dim of layers 1/6 instead")

    return Ws, bs, (h, w, c)


# ----------------------------------------------------------------------------
# The single fused Pallas kernel: 6 x (matmul + bias + activation), all in
# vregs/VMEM.  Only the final output is stored to HBM.
# ----------------------------------------------------------------------------
def _fused_autoencoder_kernel(x_ref,
                              w1, b1, w2, b2, w3, b3,
                              w4, b4, w5, b5, w6, b6,
                              o_ref):
    def layer(a, w_ref, b_ref, last):
        # bf16 x bf16 MXU matmul, f32 accumulation; bias + activation in f32.
        y = jnp.dot(a.astype(jnp.bfloat16), w_ref[...],
                    preferred_element_type=jnp.float32) + b_ref[...]
        if not last:
            return jnp.maximum(y, 0.0)
        # sigmoid: exp and (approx) reciprocal both land on the EUP slot.
        return pl.reciprocal(1.0 + jnp.exp(-y), approx=True)

    a = x_ref[...]
    a = layer(a, w1, b1, False)
    a = layer(a, w2, b2, False)
    a = layer(a, w3, b3, False)
    a = layer(a, w4, b4, False)
    a = layer(a, w5, b5, False)
    o_ref[...] = layer(a, w6, b6, True).astype(o_ref.dtype)


def fused_forward(x_nchw, Ws, bs, *, out_hw):
    """x_nchw: (N, 1, H, W) f32.  Ws/bs: pre-folded matrices (fold_params)."""
    N, Cin, H, W = x_nchw.shape
    Ho, Wo = out_hw
    Din = Ws[0].shape[0]
    Dout = Ws[-1].shape[1]

    # Cin == 1 (and Cout == 1) => NCHW flatten already matches the kernel's
    # row layout; no transposes, no batch pad/slice.
    x_flat = x_nchw.reshape(N, Cin * H * W).astype(jnp.float32)

    operands = [x_flat]
    for Wu, b in zip(Ws, bs):
        operands += [Wu, b]

    out_shape = jax.ShapeDtypeStruct((N, Dout), jnp.float32)

    TM = 128
    if N % TM == 0:
        # Row-gridded path: batch blocks shard across TensorCores (megacore /
        # v7x dual-TC); the folded weights keep a constant block index so they
        # are not re-fetched per grid step.
        in_specs = [pl.BlockSpec((TM, Din), lambda i: (i, 0))]
        for Wu, b in zip(Ws, bs):
            in_specs.append(pl.BlockSpec(Wu.shape, lambda i: (0, 0)))
            in_specs.append(pl.BlockSpec(b.shape, lambda i: (0, 0)))
        out = pl.pallas_call(
            _fused_autoencoder_kernel,
            out_shape=out_shape,
            grid=(N // TM,),
            in_specs=in_specs,
            out_specs=pl.BlockSpec((TM, Dout), lambda i: (i, 0)),
            compiler_params=pltpu.CompilerParams(
                dimension_semantics=("parallel",)),
        )(*operands)
    else:
        # Small batch: grid-less, whole arrays as single VMEM blocks.
        out = pl.pallas_call(
            _fused_autoencoder_kernel, out_shape=out_shape)(*operands)

    return out.reshape(N, 1, Ho, Wo)      # NCHW (Cout == 1)


# ----------------------------------------------------------------------------
# Pure-JAX reference (lax.conv_general_dilated) for a correctness check
# ----------------------------------------------------------------------------
def _ref_conv(x, w, b, stride, pad):
    y = jax.lax.conv_general_dilated(
        x, w, (stride, stride), [(pad, pad), (pad, pad)],
        dimension_numbers=("NCHW", "OIHW", "NCHW"))
    return y + b[None, :, None, None]


def _ref_convT(x, w, b):
    wf = jnp.transpose(jnp.flip(w, (2, 3)), (1, 0, 2, 3))       # (Cout,Cin,K,K)
    y = jax.lax.conv_general_dilated(
        x, wf, (1, 1), [(1, 2), (1, 2)], lhs_dilation=(2, 2),
        dimension_numbers=("NCHW", "OIHW", "NCHW"))
    return y + b[None, :, None, None]


def reference_forward(x, p):
    relu = lambda v: jnp.maximum(v, 0.0)
    x = relu(_ref_conv(x, p["e1w"], p["e1b"], 2, 1))
    x = relu(_ref_conv(x, p["e2w"], p["e2b"], 2, 1))
    x = relu(_ref_conv(x, p["e3w"], p["e3b"], 2, 1))
    x = relu(_ref_convT(x, p["d1w"], p["d1b"]))
    x = relu(_ref_convT(x, p["d2w"], p["d2b"]))
    x = jax.nn.sigmoid(_ref_convT(x, p["d3w"], p["d3b"]))
    return x


# ----------------------------------------------------------------------------
# Deterministic parameter init (PyTorch-style uniform fan-in bounds)
# ----------------------------------------------------------------------------
def init_params(key):
    def u(k, shape, fan_in):
        bound = 1.0 / math.sqrt(fan_in)
        return jax.random.uniform(k, shape, jnp.float32, -bound, bound)

    ks = jax.random.split(key, 12)
    p = {}
    # encoder Conv2d weights: (Cout, Cin, 3, 3)
    p["e1w"], p["e1b"] = u(ks[0], (8, 1, 3, 3), 1 * 9), u(ks[1], (8,), 1 * 9)
    p["e2w"], p["e2b"] = u(ks[2], (4, 8, 3, 3), 8 * 9), u(ks[3], (4,), 8 * 9)
    p["e3w"], p["e3b"] = u(ks[4], (4, 4, 3, 3), 4 * 9), u(ks[5], (4,), 4 * 9)
    # decoder ConvTranspose2d weights: (Cin, Cout, 3, 3)
    p["d1w"], p["d1b"] = u(ks[6], (4, 4, 3, 3), 4 * 9), u(ks[7], (4,), 4 * 9)
    p["d2w"], p["d2b"] = u(ks[8], (4, 8, 3, 3), 8 * 9), u(ks[9], (8,), 8 * 9)
    p["d3w"], p["d3b"] = u(ks[10], (8, 1, 3, 3), 1 * 9), u(ks[11], (1,), 1 * 9)
    return p


if __name__ == "__main__":
    key = jax.random.PRNGKey(0)
    pkey, xkey = jax.random.split(key)
    params = init_params(pkey)

    H = W = 16
    # One-time, host-side weight folding — OUTSIDE the jitted hot path.
    # TODO(synk): for a long-lived service, keep Ws/bs resident in VMEM across
    # calls via the cross-pallas_call DMA-future pattern (P10).
    Ws, bs, (Ho, Wo, _) = fold_params(params, H, W)

    fwd = jax.jit(fused_forward, static_argnames=("out_hw",))

    # --- Small batch (grid-less path), matches the PyTorch module usage. ----
    x = jax.random.uniform(xkey, (2, 1, H, W), jnp.float32)
    y = jax.block_until_ready(fwd(x, Ws, bs, out_hw=(Ho, Wo)))
    assert y.shape == (2, 1, Ho, Wo), y.shape
    y_ref = jax.block_until_ready(reference_forward(x, params))
    # bf16-streamed weights => tolerance loosened vs. the f32 reference.
    np.testing.assert_allclose(np.asarray(y), np.asarray(y_ref),
                               rtol=2e-2, atol=2e-2)

    # --- Larger batch (row-gridded, megacore-parallel path). ----------------
    xb = jax.random.uniform(jax.random.PRNGKey(1), (256, 1, H, W), jnp.float32)
    yb = jax.block_until_ready(fwd(xb, Ws, bs, out_hw=(Ho, Wo)))
    yb_ref = jax.block_until_ready(reference_forward(xb, params))
    np.testing.assert_allclose(np.asarray(yb), np.asarray(yb_ref),
                               rtol=2e-2, atol=2e-2)

    print("KERNEL_OK")
</pallas_src>

<mosaic_0001>
module attributes {stable_mosaic.version = 11 : i64} {
  func.func @_fused_autoencoder_kernel(%arg0: memref<2x256xf32, #tpu.memory_space<vmem>>, %arg1: memref<256x512xbf16, #tpu.memory_space<vmem>>, %arg2: memref<1x512xf32, #tpu.memory_space<vmem>>, %arg3: memref<512x64xbf16, #tpu.memory_space<vmem>>, %arg4: memref<1x64xf32, #tpu.memory_space<vmem>>, %arg5: memref<64x16xbf16, #tpu.memory_space<vmem>>, %arg6: memref<1x16xf32, #tpu.memory_space<vmem>>, %arg7: memref<16x64xbf16, #tpu.memory_space<vmem>>, %arg8: memref<1x64xf32, #tpu.memory_space<vmem>>, %arg9: memref<64x512xbf16, #tpu.memory_space<vmem>>, %arg10: memref<1x512xf32, #tpu.memory_space<vmem>>, %arg11: memref<512x256xbf16, #tpu.memory_space<vmem>>, %arg12: memref<1x256xf32, #tpu.memory_space<vmem>>, %arg13: memref<2x256xf32, #tpu.memory_space<vmem>>) attributes {dimension_semantics = [], scalar_prefetch = 0 : i64, scratch_operands = 0 : i64, tpu.core_type = #tpu.core_type<tc>} {
    %c0 = arith.constant 0 : index
    %c0_0 = arith.constant 0 : index
    %0 = vector.load %arg0[%c0, %c0_0] : memref<2x256xf32, #tpu.memory_space<vmem>>, vector<2x256xf32>
    %1 = arith.truncf %0 : vector<2x256xf32> to vector<2x256xbf16>
    %c0_1 = arith.constant 0 : index
    %c0_2 = arith.constant 0 : index
    %2 = vector.load %arg1[%c0_1, %c0_2] : memref<256x512xbf16, #tpu.memory_space<vmem>>, vector<256x512xbf16>
    %cst = arith.constant dense<0.000000e+00> : vector<2x512xf32>
    %3 = tpu.matmul %1, %2, %cst {dimension_numbers = #tpu.dot_dimension_numbers<[1], [0], [0], [1], [0, 0, 1, 1], [], []>} : vector<2x256xbf16>, vector<256x512xbf16>, vector<2x512xf32> -> vector<2x512xf32>
    %c0_3 = arith.constant 0 : index
    %c0_4 = arith.constant 0 : index
    %4 = vector.load %arg2[%c0_3, %c0_4] : memref<1x512xf32, #tpu.memory_space<vmem>>, vector<1x512xf32>
    %5 = vector.broadcast %4 : vector<1x512xf32> to vector<2x512xf32>
    %6 = arith.addf %3, %5 : vector<2x512xf32>
    %cst_5 = arith.constant 0.000000e+00 : f32
    %7 = vector.broadcast %cst_5 : f32 to vector<2x512xf32>
    %8 = arith.maximumf %6, %7 : vector<2x512xf32>
    %9 = arith.truncf %8 : vector<2x512xf32> to vector<2x512xbf16>
    %c0_6 = arith.constant 0 : index
    %c0_7 = arith.constant 0 : index
    %10 = vector.load %arg3[%c0_6, %c0_7] : memref<512x64xbf16, #tpu.memory_space<vmem>>, vector<512x64xbf16>
    %cst_8 = arith.constant dense<0.000000e+00> : vector<2x64xf32>
    %11 = tpu.matmul %9, %10, %cst_8 {dimension_numbers = #tpu.dot_dimension_numbers<[1], [0], [0], [1], [0, 0, 1, 1], [], []>} : vector<2x512xbf16>, vector<512x64xbf16>, vector<2x64xf32> -> vector<2x64xf32>
    %c0_9 = arith.constant 0 : index
    %c0_10 = arith.constant 0 : index
    %12 = vector.load %arg4[%c0_9, %c0_10] : memref<1x64xf32, #tpu.memory_space<vmem>>, vector<1x64xf32>
    %13 = vector.broadcast %12 : vector<1x64xf32> to vector<2x64xf32>
    %14 = arith.addf %11, %13 : vector<2x64xf32>
    %cst_11 = arith.constant 0.000000e+00 : f32
    %15 = vector.broadcast %cst_11 : f32 to vector<2x64xf32>
    %16 = arith.maximumf %14, %15 : vector<2x64xf32>
    %17 = arith.truncf %16 : vector<2x64xf32> to vector<2x64xbf16>
    %c0_12 = arith.constant 0 : index
    %c0_13 = arith.constant 0 : index
    %18 = vector.load %arg5[%c0_12, %c0_13] : memref<64x16xbf16, #tpu.memory_space<vmem>>, vector<64x16xbf16>
    %cst_14 = arith.constant dense<0.000000e+00> : vector<2x16xf32>
    %19 = tpu.matmul %17, %18, %cst_14 {dimension_numbers = #tpu.dot_dimension_numbers<[1], [0], [0], [1], [0, 0, 1, 1], [], []>} : vector<2x64xbf16>, vector<64x16xbf16>, vector<2x16xf32> -> vector<2x16xf32>
    %c0_15 = arith.constant 0 : index
    %c0_16 = arith.constant 0 : index
    %20 = vector.load %arg6[%c0_15, %c0_16] : memref<1x16xf32, #tpu.memory_space<vmem>>, vector<1x16xf32>
    %21 = vector.broadcast %20 : vector<1x16xf32> to vector<2x16xf32>
    %22 = arith.addf %19, %21 : vector<2x16xf32>
    %cst_17 = arith.constant 0.000000e+00 : f32
    %23 = vector.broadcast %cst_17 : f32 to vector<2x16xf32>
    %24 = arith.maximumf %22, %23 : vector<2x16xf32>
    %25 = arith.truncf %24 : vector<2x16xf32> to vector<2x16xbf16>
    %c0_18 = arith.constant 0 : index
    %c0_19 = arith.constant 0 : index
    %26 = vector.load %arg7[%c0_18, %c0_19] : memref<16x64xbf16, #tpu.memory_space<vmem>>, vector<16x64xbf16>
    %cst_20 = arith.constant dense<0.000000e+00> : vector<2x64xf32>
    %27 = tpu.matmul %25, %26, %cst_20 {dimension_numbers = #tpu.dot_dimension_numbers<[1], [0], [0], [1], [0, 0, 1, 1], [], []>} : vector<2x16xbf16>, vector<16x64xbf16>, vector<2x64xf32> -> vector<2x64xf32>
    %c0_21 = arith.constant 0 : index
    %c0_22 = arith.constant 0 : index
    %28 = vector.load %arg8[%c0_21, %c0_22] : memref<1x64xf32, #tpu.memory_space<vmem>>, vector<1x64xf32>
    %29 = vector.broadcast %28 : vector<1x64xf32> to vector<2x64xf32>
    %30 = arith.addf %27, %29 : vector<2x64xf32>
    %cst_23 = arith.constant 0.000000e+00 : f32
    %31 = vector.broadcast %cst_23 : f32 to vector<2x64xf32>
    %32 = arith.maximumf %30, %31 : vector<2x64xf32>
    %33 = arith.truncf %32 : vector<2x64xf32> to vector<2x64xbf16>
    %c0_24 = arith.constant 0 : index
    %c0_25 = arith.constant 0 : index
    %34 = vector.load %arg9[%c0_24, %c0_25] : memref<64x512xbf16, #tpu.memory_space<vmem>>, vector<64x512xbf16>
    %cst_26 = arith.constant dense<0.000000e+00> : vector<2x512xf32>
    %35 = tpu.matmul %33, %34, %cst_26 {dimension_numbers = #tpu.dot_dimension_numbers<[1], [0], [0], [1], [0, 0, 1, 1], [], []>} : vector<2x64xbf16>, vector<64x512xbf16>, vector<2x512xf32> -> vector<2x512xf32>
    %c0_27 = arith.constant 0 : index
    %c0_28 = arith.constant 0 : index
    %36 = vector.load %arg10[%c0_27, %c0_28] : memref<1x512xf32, #tpu.memory_space<vmem>>, vector<1x512xf32>
    %37 = vector.broadcast %36 : vector<1x512xf32> to vector<2x512xf32>
    %38 = arith.addf %35, %37 : vector<2x512xf32>
    %cst_29 = arith.constant 0.000000e+00 : f32
    %39 = vector.broadcast %cst_29 : f32 to vector<2x512xf32>
    %40 = arith.maximumf %38, %39 : vector<2x512xf32>
    %41 = arith.truncf %40 : vector<2x512xf32> to vector<2x512xbf16>
    %c0_30 = arith.constant 0 : index
    %c0_31 = arith.constant 0 : index
    %42 = vector.load %arg11[%c0_30, %c0_31] : memref<512x256xbf16, #tpu.memory_space<vmem>>, vector<512x256xbf16>
    %cst_32 = arith.constant dense<0.000000e+00> : vector<2x256xf32>
    %43 = tpu.matmul %41, %42, %cst_32 {dimension_numbers = #tpu.dot_dimension_numbers<[1], [0], [0], [1], [0, 0, 1, 1], [], []>} : vector<2x512xbf16>, vector<512x256xbf16>, vector<2x256xf32> -> vector<2x256xf32>
    %c0_33 = arith.constant 0 : index
    %c0_34 = arith.constant 0 : index
    %44 = vector.load %arg12[%c0_33, %c0_34] : memref<1x256xf32, #tpu.memory_space<vmem>>, vector<1x256xf32>
    %45 = vector.broadcast %44 : vector<1x256xf32> to vector<2x256xf32>
    %46 = arith.addf %43, %45 : vector<2x256xf32>
    %cst_35 = arith.constant 0.000000e+00 : f32
    %47 = vector.broadcast %cst_35 : f32 to vector<2x256xf32>
    %48 = arith.subf %47, %46 : vector<2x256xf32>
    %49 = math.exp %48 : vector<2x256xf32>
    %cst_36 = arith.constant 1.000000e+00 : f32
    %50 = vector.broadcast %cst_36 : f32 to vector<2x256xf32>
    %51 = arith.addf %50, %49 : vector<2x256xf32>
    %52 = tpu.reciprocal %51 {approx = true} : vector<2x256xf32> -> vector<2x256xf32>
    %c0_37 = arith.constant 0 : index
    %c0_38 = arith.constant 0 : index
    %53 = vector.load %arg13[%c0_37, %c0_38] : memref<2x256xf32, #tpu.memory_space<vmem>>, vector<2x256xf32>
    tpu.vector_store %arg13[%c0_37, %c0_38], %52 {strides = array<i32>} : memref<2x256xf32, #tpu.memory_space<vmem>>, vector<2x256xf32>,
    return
  }
}

</mosaic_0001>

<llo_original>
// kernel: fused_forward.1
$region0: #{fused_forward.1}
  #allocation0 [shape = 'u32[]', space=smem, size = 0x4, offset = 0x4, fixed_abs, tag = 'smem constant byte address 0x4 - core index']
  #allocation1 [shape = 'u32[144,128]{1,0:T(1,128)}', space=vmem, size = 0x12000, scoped, tag = 'internal scratch']
  %s0 = inlined_call_operand.vmem [shape: f32[2,256], index: 0, kind: input, shape index: {}]
  %s1 = inlined_call_operand.hbm [shape: bf16[256,512], index: 1, kind: input, shape index: {}]
  %s2 = inlined_call_operand.vmem [shape: f32[1,512], index: 2, kind: input, shape index: {}]
  %s3 = inlined_call_operand.vmem [shape: bf16[512,64], index: 3, kind: input, shape index: {}]
  %s4 = inlined_call_operand.vmem [shape: f32[1,64], index: 4, kind: input, shape index: {}]
  %s5 = inlined_call_operand.vmem [shape: bf16[64,16], index: 5, kind: input, shape index: {}]
  %s6 = inlined_call_operand.vmem [shape: f32[1,16], index: 6, kind: input, shape index: {}]
  %s7 = inlined_call_operand.vmem [shape: bf16[16,64], index: 7, kind: input, shape index: {}]
  %s8 = inlined_call_operand.vmem [shape: f32[1,64], index: 8, kind: input, shape index: {}]
  %s9 = inlined_call_operand.vmem [shape: bf16[64,512], index: 9, kind: input, shape index: {}]
  %s10 = inlined_call_operand.vmem [shape: f32[1,512], index: 10, kind: input, shape index: {}]
  %s11 = inlined_call_operand.hbm [shape: bf16[512,256], index: 11, kind: input, shape index: {}]
  %s12 = inlined_call_operand.vmem [shape: f32[1,256], index: 12, kind: input, shape index: {}]
  %s13 = inlined_call_operand.vmem [shape: f32[2,256], index: 13, kind: output, shape index: {}]
  %s14 = sld [smem:[#allocation0]]
  $region70: #{fused_forward.1} parent=0
    _
  %s16 = ssub.s32 1, %s14
  %s17 = scalar_select 0, %s16, %s14
  $region1: #{fused_forward.1} parent=0
    #allocation2 [shape = 'u8[262144]{0}', space=vmem, size = 0x40000, scoped, tag = 'input window, operand 1, single buffered']
    #allocation3 [shape = 's32[1]{0}', space=sflag, size = 0x4, scoped, tag = 'scoped memory for fused_forward.1']
    #allocation4 [shape = 'u8[262144]{0}', space=vmem, size = 0x40000, scoped, tag = 'input window, operand 11, single buffered']
    #allocation5 [shape = 's32[1]{0}', space=sflag, size = 0x4, scoped, tag = 'scoped memory for fused_forward.1']
    %18 = vsyncpa [#allocation3], 0
    %19 = vsyncpa [#allocation5], 0
    // Predicated region
    $region2: #{fused_forward.1} parent=1 // pred_check
      _
    $region3: #{fused_forward.1} parent=1 // pred_check_branch
      %21 = sbr.rel (0) target = $region5
    $region4: #{fused_forward.1} parent=1 // pred_region
      _
    $region5: #{fused_forward.1} parent=1 // pred_fallthru
      _
    // Predicated region
    $region6: #{fused_forward.1} parent=1 // pred_check
      _
    $region7: #{fused_forward.1} parent=1 // pred_check_branch
      %23 = sbr.rel (0) target = $region9
    $region8: #{fused_forward.1} parent=1 // pred_region
      %s25 = ssub.s32 8192, 8192
      %26 = vsyncadd [#allocation3], %s25
      %s27 = sshll.u32 [#allocation2], 4
      %s28 = int_to_ptr.vmem [resolvable:$true] %s27
      %33 = dma.hbm_to_vmem [thread:$0]  %s1, 8192, %s28, [#allocation3], 256, 256, 16
    $region9: #{fused_forward.1} parent=1 // pred_fallthru
      _
    // Predicated region
    $region10: #{fused_forward.1} parent=1 // pred_check
      _
    $region11: #{fused_forward.1} parent=1 // pred_check_branch
      %35 = sbr.rel (0) target = $region13
    $region12: #{fused_forward.1} parent=1 // pred_region
      _
    $region13: #{fused_forward.1} parent=1 // pred_fallthru
      _
    // Predicated region
    $region14: #{fused_forward.1} parent=1 // pred_check
      _
    $region15: #{fused_forward.1} parent=1 // pred_check_branch
      %37 = sbr.rel (0) target = $region17
    $region16: #{fused_forward.1} parent=1 // pred_region
      _
    $region17: #{fused_forward.1} parent=1 // pred_fallthru
      _
    // Predicated region
    $region18: #{fused_forward.1} parent=1 // pred_check
      _
    $region19: #{fused_forward.1} parent=1 // pred_check_branch
      %39 = sbr.rel (0) target = $region21
    $region20: #{fused_forward.1} parent=1 // pred_region
      _
    $region21: #{fused_forward.1} parent=1 // pred_fallthru
      _
    // Predicated region
    $region22: #{fused_forward.1} parent=1 // pred_check
      _
    $region23: #{fused_forward.1} parent=1 // pred_check_branch
      %41 = sbr.rel (0) target = $region25
    $region24: #{fused_forward.1} parent=1 // pred_region
      _
    $region25: #{fused_forward.1} parent=1 // pred_fallthru
      _
    // Predicated region
    $region26: #{fused_forward.1} parent=1 // pred_check
      _
    $region27: #{fused_forward.1} parent=1 // pred_check_branch
      %43 = sbr.rel (0) target = $region29
    $region28: #{fused_forward.1} parent=1 // pred_region
      _
    $region29: #{fused_forward.1} parent=1 // pred_fallthru
      _
    // Predicated region
    $region30: #{fused_forward.1} parent=1 // pred_check
      _
    $region31: #{fused_forward.1} parent=1 // pred_check_branch
      %45 = sbr.rel (0) target = $region33
    $region32: #{fused_forward.1} parent=1 // pred_region
      _
    $region33: #{fused_forward.1} parent=1 // pred_fallthru
      _
    // Predicated region
    $region34: #{fused_forward.1} parent=1 // pred_check
      _
    $region35: #{fused_forward.1} parent=1 // pred_check_branch
      %47 = sbr.rel (0) target = $region37
    $region36: #{fused_forward.1} parent=1 // pred_region
      _
    $region37: #{fused_forward.1} parent=1 // pred_fallthru
      _
    // Predicated region
    $region38: #{fused_forward.1} parent=1 // pred_check
      _
    $region39: #{fused_forward.1} parent=1 // pred_check_branch
      %49 = sbr.rel (0) target = $region41
    $region40: #{fused_forward.1} parent=1 // pred_region
      _
    $region41: #{fused_forward.1} parent=1 // pred_fallthru
      _
    // Predicated region
    $region42: #{fused_forward.1} parent=1 // pred_check
      _
    $region43: #{fused_forward.1} parent=1 // pred_check_branch
      %51 = sbr.rel (0) target = $region45
    $region44: #{fused_forward.1} parent=1 // pred_region
      _
    $region45: #{fused_forward.1} parent=1 // pred_fallthru
      _
    // Predicated region
    $region46: #{fused_forward.1} parent=1 // pred_check
      _
    $region47: #{fused_forward.1} parent=1 // pred_check_branch
      %53 = sbr.rel (0) target = $region49
    $region48: #{fused_forward.1} parent=1 // pred_region
      %s55 = ssub.s32 8192, 8192
      %56 = vsyncadd [#allocation5], %s55
      %s57 = sshll.u32 [#allocation4], 4
      %s58 = int_to_ptr.vmem [resolvable:$true] %s57
      %63 = dma.hbm_to_vmem [thread:$0]  %s11, 8192, %s58, [#allocation5], 128, 128, 8
    $region49: #{fused_forward.1} parent=1 // pred_fallthru
      _
    // Predicated region
    $region50: #{fused_forward.1} parent=1 // pred_check
      _
    $region51: #{fused_forward.1} parent=1 // pred_check_branch
      %65 = sbr.rel (0) target = $region53
    $region52: #{fused_forward.1} parent=1 // pred_region
      _
    $region53: #{fused_forward.1} parent=1 // pred_fallthru
      _
    // Predicated region
    $region54: #{fused_forward.1} parent=1 // pred_check
      _
    $region55: #{fused_forward.1} parent=1 // pred_check_branch
      %67 = sbr.rel (0) target = $region57
    $region56: #{fused_forward.1} parent=1 // pred_region
      %68 = dma.done [#allocation3], 8192
    $region57: #{fused_forward.1} parent=1 // pred_fallthru
      _
    // Predicated region
    $region58: #{fused_forward.1} parent=1 // pred_check
      _
    $region59: #{fused_forward.1} parent=1 // pred_check_branch
      %70 = sbr.rel (0) target = $region61
    $region60: #{fused_forward.1} parent=1 // pred_region
      %71 = dma.done [#allocation5], 8192
    $region61: #{fused_forward.1} parent=1 // pred_fallthru
      _
    %v73 = vld [vmem:[%s0] sm:$0xf]
    %v76 = vunpack.c.l.s4 1983009808
    %v77 = vunpack.c.0.s8 %v76
    %v78 = vlaneseq
    %v79 = vshrl.u32 %v78, 7
    %v80 = vsub.s32 %v77, %v79
    %v81 = vrot.slane %v73, %v80
    %v82 = vcombine.high %v81, %v81
    %v85 = vpack.c.bf16 %v81, %v81
    %v86 = vpack.c.bf16 %v82, %v82
    %v87 = vld [vmem:[#allocation2] sm:$0xff]
    %v88 = vld [vmem:[#allocation2 + $0x8] sm:$0xff]
    %v89 = vld [vmem:[#allocation2 + $0x10] sm:$0xff]
    %v90 = vld [vmem:[#allocation2 + $0x18] sm:$0xff]
    %v91 = vld [vmem:[#allocation2 + $0x20] sm:$0xff]
    %v92 = vld [vmem:[#allocation2 + $0x28] sm:$0xff]
    %v93 = vld [vmem:[#allocation2 + $0x30] sm:$0xff]
    %v94 = vld [vmem:[#allocation2 + $0x38] sm:$0xff]
    %v95 = vld [vmem:[#allocation2 + $0x40] sm:$0xff]
    %v96 = vld [vmem:[#allocation2 + $0x48] sm:$0xff]
    %v97 = vld [vmem:[#allocation2 + $0x50] sm:$0xff]
    %v98 = vld [vmem:[#allocation2 + $0x58] sm:$0xff]
    %v99 = vld [vmem:[#allocation2 + $0x60] sm:$0xff]
    %v100 = vld [vmem:[#allocation2 + $0x68] sm:$0xff]
    %v101 = vld [vmem:[#allocation2 + $0x70] sm:$0xff]
    %v102 = vld [vmem:[#allocation2 + $0x78] sm:$0xff]
    %v103 = vld [vmem:[#allocation2 + $0x80] sm:$0xff]
    %v104 = vld [vmem:[#allocation2 + $0x88] sm:$0xff]
    %v105 = vld [vmem:[#allocation2 + $0x90] sm:$0xff]
    %v106 = vld [vmem:[#allocation2 + $0x98] sm:$0xff]
    %v107 = vld [vmem:[#allocation2 + $0xa0] sm:$0xff]
    %v108 = vld [vmem:[#allocation2 + $0xa8] sm:$0xff]
    %v109 = vld [vmem:[#allocation2 + $0xb0] sm:$0xff]
    %v110 = vld [vmem:[#allocation2 + $0xb8] sm:$0xff]
    %v111 = vld [vmem:[#allocation2 + $0xc0] sm:$0xff]
    %v112 = vld [vmem:[#allocation2 + $0xc8] sm:$0xff]
    %v113 = vld [vmem:[#allocation2 + $0xd0] sm:$0xff]
    %v114 = vld [vmem:[#allocation2 + $0xd8] sm:$0xff]
    %v115 = vld [vmem:[#allocation2 + $0xe0] sm:$0xff]
    %v116 = vld [vmem:[#allocation2 + $0xe8] sm:$0xff]
    %v117 = vld [vmem:[#allocation2 + $0xf0] sm:$0xff]
    %v118 = vld [vmem:[#allocation2 + $0xf8] sm:$0xff]
    %v119 = vld [vmem:[#allocation2 + $0x100] sm:$0xff]
    %v120 = vld [vmem:[#allocation2 + $0x108] sm:$0xff]
    %v121 = vld [vmem:[#allocation2 + $0x110] sm:$0xff]
    %v122 = vld [vmem:[#allocation2 + $0x118] sm:$0xff]
    %v123 = vld [vmem:[#allocation2 + $0x120] sm:$0xff]
    %v124 = vld [vmem:[#allocation2 + $0x128] sm:$0xff]
    %v125 = vld [vmem:[#allocation2 + $0x130] sm:$0xff]
    %v126 = vld [vmem:[#allocation2 + $0x138] sm:$0xff]
    %v127 = vld [vmem:[#allocation2 + $0x140] sm:$0xff]
    %v128 = vld [vmem:[#allocation2 + $0x148] sm:$0xff]
    %v129 = vld [vmem:[#allocation2 + $0x150] sm:$0xff]
    %v130 = vld [vmem:[#allocation2 + $0x158] sm:$0xff]
    %v131 = vld [vmem:[#allocation2 + $0x160] sm:$0xff]
    %v132 = vld [vmem:[#allocation2 + $0x168] sm:$0xff]
    %v133 = vld [vmem:[#allocation2 + $0x170] sm:$0xff]
    %v134 = vld [vmem:[#allocation2 + $0x178] sm:$0xff]
    %v135 = vld [vmem:[#allocation2 + $0x180] sm:$0xff]
    %v136 = vld [vmem:[#allocation2 + $0x188] sm:$0xff]
    %v137 = vld [vmem:[#allocation2 + $0x190] sm:$0xff]
    %v138 = vld [vmem:[#allocation2 + $0x198] sm:$0xff]
    %v139 = vld [vmem:[#allocation2 + $0x1a0] sm:$0xff]
    %v140 = vld [vmem:[#allocation2 + $0x1a8] sm:$0xff]
    %v141 = vld [vmem:[#allocation2 + $0x1b0] sm:$0xff]
    %v142 = vld [vmem:[#allocation2 + $0x1b8] sm:$0xff]
    %v143 = vld [vmem:[#allocation2 + $0x1c0] sm:$0xff]
    %v144 = vld [vmem:[#allocation2 + $0x1c8] sm:$0xff]
    %v145 = vld [vmem:[#allocation2 + $0x1d0] sm:$0xff]
    %v146 = vld [vmem:[#allocation2 + $0x1d8] sm:$0xff]
    %v147 = vld [vmem:[#allocation2 + $0x1e0] sm:$0xff]
    %v148 = vld [vmem:[#allocation2 + $0x1e8] sm:$0xff]
    %v149 = vld [vmem:[#allocation2 + $0x1f0] sm:$0xff]
    %v150 = vld [vmem:[#allocation2 + $0x1f8] sm:$0xff]
    %v151 = vld [vmem:[%s2] sm:$0xf]
    %v153 = vlaneseq
    %v154 = vshrl.u32 %v153, 7
    %v155 = vsub.s32 0, %v154
    %v156 = vrot.slane %v151, %v155
    %v157 = vlaneseq
    %v158 = vshrl.u32 %v157, 7
    %v159 = vsub.s32 1, %v158
    %v160 = vrot.slane %v151, %v159
    %v161 = vlaneseq
    %v162 = vshrl.u32 %v161, 7
    %v163 = vsub.s32 2, %v162
    %v164 = vrot.slane %v151, %v163
    %v165 = vlaneseq
    %v166 = vshrl.u32 %v165, 7
    %v167 = vsub.s32 3, %v166
    %v168 = vrot.slane %v151, %v167
    %v237 = vunpack.c.l.b16 %v87
    %v238 = vunpack.c.h.b16 %v87
    %v239 = vunpack.c.l.b16 %v88
    %v240 = vunpack.c.h.b16 %v88
    %v241 = vunpack.c.l.b16 %v89
    %v242 = vunpack.c.h.b16 %v89
    %v243 = vunpack.c.l.b16 %v90
    %v244 = vunpack.c.h.b16 %v90
    %v245 = vunpack.c.l.b16 %v91
    %v246 = vunpack.c.h.b16 %v91
    %v247 = vunpack.c.l.b16 %v92
    %v248 = vunpack.c.h.b16 %v92
    %v249 = vunpack.c.l.b16 %v93
    %v250 = vunpack.c.h.b16 %v93
    %v251 = vunpack.c.l.b16 %v94
    %v252 = vunpack.c.h.b16 %v94
    %v253 = vunpack.c.l.b16 %v95
    %v254 = vunpack.c.h.b16 %v95
    %v255 = vunpack.c.l.b16 %v96
    %v256 = vunpack.c.h.b16 %v96
    %v257 = vunpack.c.l.b16 %v97
    %v258 = vunpack.c.h.b16 %v97
    %v259 = vunpack.c.l.b16 %v98
    %v260 = vunpack.c.h.b16 %v98
    %v261 = vunpack.c.l.b16 %v99
    %v262 = vunpack.c.h.b16 %v99
    %v263 = vunpack.c.l.b16 %v100
    %v264 = vunpack.c.h.b16 %v100
    %v265 = vunpack.c.l.b16 %v101
    %v266 = vunpack.c.h.b16 %v101
    %v267 = vunpack.c.l.b16 %v102
    %v268 = vunpack.c.h.b16 %v102
    %v269 = vunpack.c.l.b16 %v103
    %v270 = vunpack.c.h.b16 %v103
    %v271 = vunpack.c.l.b16 %v104
    %v272 = vunpack.c.h.b16 %v104
    %v273 = vunpack.c.l.b16 %v105
    %v274 = vunpack.c.h.b16 %v105
    %v275 = vunpack.c.l.b16 %v106
    %v276 = vunpack.c.h.b16 %v106
    %v277 = vunpack.c.l.b16 %v107
    %v278 = vunpack.c.h.b16 %v107
    %v279 = vunpack.c.l.b16 %v108
    %v280 = vunpack.c.h.b16 %v108
    %v281 = vunpack.c.l.b16 %v109
    %v282 = vunpack.c.h.b16 %v109
    %v283 = vunpack.c.l.b16 %v110
    %v284 = vunpack.c.h.b16 %v110
    %v285 = vunpack.c.l.b16 %v111
    %v286 = vunpack.c.h.b16 %v111
    %v287 = vunpack.c.l.b16 %v112
    %v288 = vunpack.c.h.b16 %v112
    %v289 = vunpack.c.l.b16 %v113
    %v290 = vunpack.c.h.b16 %v113
    %v291 = vunpack.c.l.b16 %v114
    %v292 = vunpack.c.h.b16 %v114
    %v293 = vunpack.c.l.b16 %v115
    %v294 = vunpack.c.h.b16 %v115
    %v295 = vunpack.c.l.b16 %v116
    %v296 = vunpack.c.h.b16 %v116
    %v297 = vunpack.c.l.b16 %v117
    %v298 = vunpack.c.h.b16 %v117
    %v299 = vunpack.c.l.b16 %v118
    %v300 = vunpack.c.h.b16 %v118
    %v301 = vunpack.c.l.b16 %v119
    %v302 = vunpack.c.h.b16 %v119
    %v303 = vunpack.c.l.b16 %v120
    %v304 = vunpack.c.h.b16 %v120
    %v305 = vunpack.c.l.b16 %v121
    %v306 = vunpack.c.h.b16 %v121
    %v307 = vunpack.c.l.b16 %v122
    %v308 = vunpack.c.h.b16 %v122
    %v309 = vunpack.c.l.b16 %v123
    %v310 = vunpack.c.h.b16 %v123
    %v311 = vunpack.c.l.b16 %v124
    %v312 = vunpack.c.h.b16 %v124
    %v313 = vunpack.c.l.b16 %v125
    %v314 = vunpack.c.h.b16 %v125
    %v315 = vunpack.c.l.b16 %v126
    %v316 = vunpack.c.h.b16 %v126
    %v317 = vunpack.c.l.b16 %v127
    %v318 = vunpack.c.h.b16 %v127
    %v319 = vunpack.c.l.b16 %v128
    %v320 = vunpack.c.h.b16 %v128
    %v321 = vunpack.c.l.b16 %v129
    %v322 = vunpack.c.h.b16 %v129
    %v323 = vunpack.c.l.b16 %v130
    %v324 = vunpack.c.h.b16 %v130
    %v325 = vunpack.c.l.b16 %v131
    %v326 = vunpack.c.h.b16 %v131
    %v327 = vunpack.c.l.b16 %v132
    %v328 = vunpack.c.h.b16 %v132
    %v329 = vunpack.c.l.b16 %v133
    %v330 = vunpack.c.h.b16 %v133
    %v331 = vunpack.c.l.b16 %v134
    %v332 = vunpack.c.h.b16 %v134
    %v333 = vunpack.c.l.b16 %v135
    %v334 = vunpack.c.h.b16 %v135
    %v335 = vunpack.c.l.b16 %v136
    %v336 = vunpack.c.h.b16 %v136
    %v337 = vunpack.c.l.b16 %v137
    %v338 = vunpack.c.h.b16 %v137
    %v339 = vunpack.c.l.b16 %v138
    %v340 = vunpack.c.h.b16 %v138
    %v341 = vunpack.c.l.b16 %v139
    %v342 = vunpack.c.h.b16 %v139
    %v343 = vunpack.c.l.b16 %v140
    %v344 = vunpack.c.h.b16 %v140
    %v345 = vunpack.c.l.b16 %v141
    %v346 = vunpack.c.h.b16 %v141
    %v347 = vunpack.c.l.b16 %v142
    %v348 = vunpack.c.h.b16 %v142
    %v349 = vunpack.c.l.b16 %v143
    %v350 = vunpack.c.h.b16 %v143
    %v351 = vunpack.c.l.b16 %v144
    %v352 = vunpack.c.h.b16 %v144
    %v353 = vunpack.c.l.b16 %v145
    %v354 = vunpack.c.h.b16 %v145
    %v355 = vunpack.c.l.b16 %v146
    %v356 = vunpack.c.h.b16 %v146
    %v357 = vunpack.c.l.b16 %v147
    %v358 = vunpack.c.h.b16 %v147
    %v359 = vunpack.c.l.b16 %v148
    %v360 = vunpack.c.h.b16 %v148
    %v361 = vunpack.c.l.b16 %v149
    %v362 = vunpack.c.h.b16 %v149
    %v363 = vunpack.c.l.b16 %v150
    %v364 = vunpack.c.h.b16 %v150
    %v365 = vpack.c.b16 %v241, %v237
    %v366 = vpack.c.b16 %v242, %v238
    %v367 = vpack.c.b16 %v243, %v239
    %v368 = vpack.c.b16 %v244, %v240
    %v369 = vpack.c.b16 %v249, %v245
    %v370 = vpack.c.b16 %v250, %v246
    %v371 = vpack.c.b16 %v251, %v247
    %v372 = vpack.c.b16 %v252, %v248
    %v373 = vpack.c.b16 %v257, %v253
    %v374 = vpack.c.b16 %v258, %v254
    %v375 = vpack.c.b16 %v259, %v255
    %v376 = vpack.c.b16 %v260, %v256
    %v377 = vpack.c.b16 %v265, %v261
    %v378 = vpack.c.b16 %v266, %v262
    %v379 = vpack.c.b16 %v267, %v263
    %v380 = vpack.c.b16 %v268, %v264
    %v381 = vpack.c.b16 %v273, %v269
    %v382 = vpack.c.b16 %v274, %v270
    %v383 = vpack.c.b16 %v275, %v271
    %v384 = vpack.c.b16 %v276, %v272
    %v385 = vpack.c.b16 %v281, %v277
    %v386 = vpack.c.b16 %v282, %v278
    %v387 = vpack.c.b16 %v283, %v279
    %v388 = vpack.c.b16 %v284, %v280
    %v389 = vpack.c.b16 %v289, %v285
    %v390 = vpack.c.b16 %v290, %v286
    %v391 = vpack.c.b16 %v291, %v287
    %v392 = vpack.c.b16 %v292, %v288
    %v393 = vpack.c.b16 %v297, %v293
    %v394 = vpack.c.b16 %v298, %v294
    %v395 = vpack.c.b16 %v299, %v295
    %v396 = vpack.c.b16 %v300, %v296
    %v397 = vpack.c.b16 %v305, %v301
    %v398 = vpack.c.b16 %v306, %v302
    %v399 = vpack.c.b16 %v307, %v303
    %v400 = vpack.c.b16 %v308, %v304
    %v401 = vpack.c.b16 %v313, %v309
    %v402 = vpack.c.b16 %v314, %v310
    %v403 = vpack.c.b16 %v315, %v311
    %v404 = vpack.c.b16 %v316, %v312
    %v405 = vpack.c.b16 %v321, %v317
    %v406 = vpack.c.b16 %v322, %v318
    %v407 = vpack.c.b16 %v323, %v319
    %v408 = vpack.c.b16 %v324, %v320
    %v409 = vpack.c.b16 %v329, %v325
    %v410 = vpack.c.b16 %v330, %v326
    %v411 = vpack.c.b16 %v331, %v327
    %v412 = vpack.c.b16 %v332, %v328
    %v413 = vpack.c.b16 %v337, %v333
    %v414 = vpack.c.b16 %v338, %v334
    %v415 = vpack.c.b16 %v339, %v335
    %v416 = vpack.c.b16 %v340, %v336
    %v417 = vpack.c.b16 %v345, %v341
    %v418 = vpack.c.b16 %v346, %v342
    %v419 = vpack.c.b16 %v347, %v343
    %v420 = vpack.c.b16 %v348, %v344
    %v421 = vpack.c.b16 %v353, %v349
    %v422 = vpack.c.b16 %v354, %v350
    %v423 = vpack.c.b16 %v355, %v351
    %v424 = vpack.c.b16 %v356, %v352
    %v425 = vpack.c.b16 %v361, %v357
    %v426 = vpack.c.b16 %v362, %v358
    %v427 = vpack.c.b16 %v363, %v359
    %v428 = vpack.c.b16 %v364, %v360
    %493 = vmatprep.subr.bf16.mxu0 %v366
    %494 = vmatpush1.bf16.msra.mxu0 %v365
    %495 = vmatprep.subr.bf16.mxu0 %v370
    %496 = vmatpush1.bf16.msra.mxu0 %v369
    %497 = vmatprep.subr.bf16.mxu0 %v374
    %498 = vmatpush1.bf16.msra.mxu0 %v373
    %499 = vmatprep.subr.bf16.mxu0 %v378
    %500 = vmatpush1.bf16.msra.mxu0 %v377
    %501 = vmatprep.subr.bf16.mxu0 %v382
    %502 = vmatpush1.bf16.msra.mxu0 %v381
    %503 = vmatprep.subr.bf16.mxu0 %v386
    %504 = vmatpush1.bf16.msra.mxu0 %v385
    %505 = vmatprep.subr.bf16.mxu0 %v390
    %506 = vmatpush1.bf16.msra.mxu0 %v389
    %507 = vmatprep.subr.bf16.mxu0 %v394
    %508 = vmatpush1.bf16.msra.mxu0 %v393
    %509 = vmatprep.subr.bf16.mxu0 %v398
    %510 = vmatpush1.bf16.msra.mxu0 %v397
    %511 = vmatprep.subr.bf16.mxu0 %v402
    %512 = vmatpush1.bf16.msra.mxu0 %v401
    %513 = vmatprep.subr.bf16.mxu0 %v406
    %514 = vmatpush1.bf16.msra.mxu0 %v405
    %515 = vmatprep.subr.bf16.mxu0 %v410
    %516 = vmatpush1.bf16.msra.mxu0 %v409
    %517 = vmatprep.subr.bf16.mxu0 %v414
    %518 = vmatpush1.bf16.msra.mxu0 %v413
    %519 = vmatprep.subr.bf16.mxu0 %v418
    %520 = vmatpush1.bf16.msra.mxu0 %v417
    %521 = vmatprep.subr.bf16.mxu0 %v422
    %522 = vmatpush1.bf16.msra.mxu0 %v421
    %523 = vmatprep.subr.bf16.mxu0 %v426
    %524 = vmatpush1.bf16.msra.mxu0 %v425
    %525 = vmatprep.mubr.bf16.mxu0 %v86
    %526 = vmatmul.mubr.bf16.gmra.mrb[0].mxu0 %v85
    %v527 = vpop.f32.mrb[0].mxu0
    %v528 = vadd.f32 %v156, %v527
    %v529 = vpop.f32.mrb[0].mxu0
    %v530 = vadd.f32 %v160, %v529
    %v531 = vpop.f32.mrb[0].mxu0
    %v532 = vpop.f32.mrb[0].mxu0
    %533 = vdwg.mxu0
    %534 = vmatprep.subr.bf16.mxu0 %v368
    %535 = vmatpush1.bf16.msra.mxu0 %v367
    %536 = vmatprep.subr.bf16.mxu0 %v372
    %537 = vmatpush1.bf16.msra.mxu0 %v371
    %538 = vmatprep.subr.bf16.mxu0 %v376
    %539 = vmatpush1.bf16.msra.mxu0 %v375
    %540 = vmatprep.subr.bf16.mxu0 %v380
    %541 = vmatpush1.bf16.msra.mxu0 %v379
    %542 = vmatprep.subr.bf16.mxu0 %v384
    %543 = vmatpush1.bf16.msra.mxu0 %v383
    %544 = vmatprep.subr.bf16.mxu0 %v388
    %545 = vmatpush1.bf16.msra.mxu0 %v387
    %546 = vmatprep.subr.bf16.mxu0 %v392
    %547 = vmatpush1.bf16.msra.mxu0 %v391
    %548 = vmatprep.subr.bf16.mxu0 %v396
    %549 = vmatpush1.bf16.msra.mxu0 %v395
    %550 = vmatprep.subr.bf16.mxu0 %v400
    %551 = vmatpush1.bf16.msra.mxu0 %v399
    %552 = vmatprep.subr.bf16.mxu0 %v404
    %553 = vmatpush1.bf16.msra.mxu0 %v403
    %554 = vmatprep.subr.bf16.mxu0 %v408
    %555 = vmatpush1.bf16.msra.mxu0 %v407
    %556 = vmatprep.subr.bf16.mxu0 %v412
    %557 = vmatpush1.bf16.msra.mxu0 %v411
    %558 = vmatprep.subr.bf16.mxu0 %v416
    %559 = vmatpush1.bf16.msra.mxu0 %v415
    %560 = vmatprep.subr.bf16.mxu0 %v420
    %561 = vmatpush1.bf16.msra.mxu0 %v419
    %562 = vmatprep.subr.bf16.mxu0 %v424
    %563 = vmatpush1.bf16.msra.mxu0 %v423
    %564 = vmatprep.subr.bf16.mxu0 %v428
    %565 = vmatpush1.bf16.msra.mxu0 %v427
    %566 = vmatprep.mubr.bf16.mxu0 %v86
    %567 = vmatmul.mubr.bf16.gmra.mrb[0].mxu0 %v85
    %v568 = vpop.f32.mrb[0].mxu0
    %v569 = vadd.f32 %v164, %v568
    %v570 = vpop.f32.mrb[0].mxu0
    %v571 = vadd.f32 %v168, %v570
    %v572 = vpop.f32.mrb[0].mxu0
    %v573 = vpop.f32.mrb[0].mxu0
    %574 = vdwg.mxu0
    %v575 = vmax.f32 %v528, 0.0
    %v576 = vmax.f32 %v530, 0.0
    %v577 = vmax.f32 %v569, 0.0
    %v578 = vmax.f32 %v571, 0.0
    %v579 = vpack.c.bf16 %v575, %v575
    %v580 = vpack.c.bf16 %v576, %v576
    %v581 = vpack.c.bf16 %v577, %v577
    %v582 = vpack.c.bf16 %v578, %v578
    %v583 = vld [vmem:[%s3] sm:$0xf]
    %v584 = vld [vmem:[%s3 + $0x4] sm:$0xf]
    %v585 = vld [vmem:[%s3 + $0x8] sm:$0xf]
    %v586 = vld [vmem:[%s3 + $0xc] sm:$0xf]
    %v587 = vld [vmem:[%s3 + $0x10] sm:$0xf]
    %v588 = vld [vmem:[%s3 + $0x14] sm:$0xf]
    %v589 = vld [vmem:[%s3 + $0x18] sm:$0xf]
    %v590 = vld [vmem:[%s3 + $0x1c] sm:$0xf]
    %v591 = vld [vmem:[%s3 + $0x20] sm:$0xf]
    %v592 = vld [vmem:[%s3 + $0x24] sm:$0xf]
    %v593 = vld [vmem:[%s3 + $0x28] sm:$0xf]
    %v594 = vld [vmem:[%s3 + $0x2c] sm:$0xf]
    %v595 = vld [vmem:[%s3 + $0x30] sm:$0xf]
    %v596 = vld [vmem:[%s3 + $0x34] sm:$0xf]
    %v597 = vld [vmem:[%s3 + $0x38] sm:$0xf]
    %v598 = vld [vmem:[%s3 + $0x3c] sm:$0xf]
    %v599 = vld [vmem:[%s3 + $0x40] sm:$0xf]
    %v600 = vld [vmem:[%s3 + $0x44] sm:$0xf]
    %v601 = vld [vmem:[%s3 + $0x48] sm:$0xf]
    %v602 = vld [vmem:[%s3 + $0x4c] sm:$0xf]
    %v603 = vld [vmem:[%s3 + $0x50] sm:$0xf]
    %v604 = vld [vmem:[%s3 + $0x54] sm:$0xf]
    %v605 = vld [vmem:[%s3 + $0x58] sm:$0xf]
    %v606 = vld [vmem:[%s3 + $0x5c] sm:$0xf]
    %v607 = vld [vmem:[%s3 + $0x60] sm:$0xf]
    %v608 = vld [vmem:[%s3 + $0x64] sm:$0xf]
    %v609 = vld [vmem:[%s3 + $0x68] sm:$0xf]
    %v610 = vld [vmem:[%s3 + $0x6c] sm:$0xf]
    %v611 = vld [vmem:[%s3 + $0x70] sm:$0xf]
    %v612 = vld [vmem:[%s3 + $0x74] sm:$0xf]
    %v613 = vld [vmem:[%s3 + $0x78] sm:$0xf]
    %v614 = vld [vmem:[%s3 + $0x7c] sm:$0xf]
    %v615 = vld [vmem:[%s3 + $0x80] sm:$0xf]
    %v616 = vld [vmem:[%s3 + $0x84] sm:$0xf]
    %v617 = vld [vmem:[%s3 + $0x88] sm:$0xf]
    %v618 = vld [vmem:[%s3 + $0x8c] sm:$0xf]
    %v619 = vld [vmem:[%s3 + $0x90] sm:$0xf]
    %v620 = vld [vmem:[%s3 + $0x94] sm:$0xf]
    %v621 = vld [vmem:[%s3 + $0x98] sm:$0xf]
    %v622 = vld [vmem:[%s3 + $0x9c] sm:$0xf]
    %v623 = vld [vmem:[%s3 + $0xa0] sm:$0xf]
    %v624 = vld [vmem:[%s3 + $0xa4] sm:$0xf]
    %v625 = vld [vmem:[%s3 + $0xa8] sm:$0xf]
    %v626 = vld [vmem:[%s3 + $0xac] sm:$0xf]
    %v627 = vld [vmem:[%s3 + $0xb0] sm:$0xf]
    %v628 = vld [vmem:[%s3 + $0xb4] sm:$0xf]
    %v629 = vld [vmem:[%s3 + $0xb8] sm:$0xf]
    %v630 = vld [vmem:[%s3 + $0xbc] sm:$0xf]
    %v631 = vld [vmem:[%s3 + $0xc0] sm:$0xf]
    %v632 = vld [vmem:[%s3 + $0xc4] sm:$0xf]
    %v633 = vld [vmem:[%s3 + $0xc8] sm:$0xf]
    %v634 = vld [vmem:[%s3 + $0xcc] sm:$0xf]
    %v635 = vld [vmem:[%s3 + $0xd0] sm:$0xf]
    %v636 = vld [vmem:[%s3 + $0xd4] sm:$0xf]
    %v637 = vld [vmem:[%s3 + $0xd8] sm:$0xf]
    %v638 = vld [vmem:[%s3 + $0xdc] sm:$0xf]
    %v639 = vld [vmem:[%s3 + $0xe0] sm:$0xf]
    %v640 = vld [vmem:[%s3 + $0xe4] sm:$0xf]
    %v641 = vld [vmem:[%s3 + $0xe8] sm:$0xf]
    %v642 = vld [vmem:[%s3 + $0xec] sm:$0xf]
    %v643 = vld [vmem:[%s3 + $0xf0] sm:$0xf]
    %v644 = vld [vmem:[%s3 + $0xf4] sm:$0xf]
    %v645 = vld [vmem:[%s3 + $0xf8] sm:$0xf]
    %v646 = vld [vmem:[%s3 + $0xfc] sm:$0xf]
    %v647 = vld [vmem:[%s4] sm:$0x1]
    %v649 = vlaneseq
    %v650 = vshrl.u32 %v649, 7
    %v651 = vsub.s32 0, %v650
    %v652 = vrot.slane %v647, %v651
    %v718 = vunpack.c.l.b16 %v583
    %v719 = vunpack.c.l.b16 %v584
    %v720 = vunpack.c.l.b16 %v585
    %v721 = vunpack.c.l.b16 %v586
    %v722 = vunpack.c.l.b16 %v587
    %v723 = vunpack.c.l.b16 %v588
    %v724 = vunpack.c.l.b16 %v589
    %v725 = vunpack.c.l.b16 %v590
    %v726 = vunpack.c.l.b16 %v591
    %v727 = vunpack.c.l.b16 %v592
    %v728 = vunpack.c.l.b16 %v593
    %v729 = vunpack.c.l.b16 %v594
    %v730 = vunpack.c.l.b16 %v595
    %v731 = vunpack.c.l.b16 %v596
    %v732 = vunpack.c.l.b16 %v597
    %v733 = vunpack.c.l.b16 %v598
    %v734 = vunpack.c.l.b16 %v599
    %v735 = vunpack.c.l.b16 %v600
    %v736 = vunpack.c.l.b16 %v601
    %v737 = vunpack.c.l.b16 %v602
    %v738 = vunpack.c.l.b16 %v603
    %v739 = vunpack.c.l.b16 %v604
    %v740 = vunpack.c.l.b16 %v605
    %v741 = vunpack.c.l.b16 %v606
    %v742 = vunpack.c.l.b16 %v607
    %v743 = vunpack.c.l.b16 %v608
    %v744 = vunpack.c.l.b16 %v609
    %v745 = vunpack.c.l.b16 %v610
    %v746 = vunpack.c.l.b16 %v611
    %v747 = vunpack.c.l.b16 %v612
    %v748 = vunpack.c.l.b16 %v613
    %v749 = vunpack.c.l.b16 %v614
    %v750 = vunpack.c.l.b16 %v615
    %v751 = vunpack.c.l.b16 %v616
    %v752 = vunpack.c.l.b16 %v617
    %v753 = vunpack.c.l.b16 %v618
    %v754 = vunpack.c.l.b16 %v619
    %v755 = vunpack.c.l.b16 %v620
    %v756 = vunpack.c.l.b16 %v621
    %v757 = vunpack.c.l.b16 %v622
    %v758 = vunpack.c.l.b16 %v623
    %v759 = vunpack.c.l.b16 %v624
    %v760 = vunpack.c.l.b16 %v625
    %v761 = vunpack.c.l.b16 %v626
    %v762 = vunpack.c.l.b16 %v627
    %v763 = vunpack.c.l.b16 %v628
    %v764 = vunpack.c.l.b16 %v629
    %v765 = vunpack.c.l.b16 %v630
    %v766 = vunpack.c.l.b16 %v631
    %v767 = vunpack.c.l.b16 %v632
    %v768 = vunpack.c.l.b16 %v633
    %v769 = vunpack.c.l.b16 %v634
    %v770 = vunpack.c.l.b16 %v635
    %v771 = vunpack.c.l.b16 %v636
    %v772 = vunpack.c.l.b16 %v637
    %v773 = vunpack.c.l.b16 %v638
    %v774 = vunpack.c.l.b16 %v639
    %v775 = vunpack.c.l.b16 %v640
    %v776 = vunpack.c.l.b16 %v641
    %v777 = vunpack.c.l.b16 %v642
    %v778 = vunpack.c.l.b16 %v643
    %v779 = vunpack.c.l.b16 %v644
    %v780 = vunpack.c.l.b16 %v645
    %v781 = vunpack.c.l.b16 %v646
    %v782 = vpack.c.b16 %v719, %v718
    %v783 = vpack.c.b16 %v721, %v720
    %v784 = vpack.c.b16 %v723, %v722
    %v785 = vpack.c.b16 %v725, %v724
    %v786 = vpack.c.b16 %v727, %v726
    %v787 = vpack.c.b16 %v729, %v728
    %v788 = vpack.c.b16 %v731, %v730
    %v789 = vpack.c.b16 %v733, %v732
    %v790 = vpack.c.b16 %v735, %v734
    %v791 = vpack.c.b16 %v737, %v736
    %v792 = vpack.c.b16 %v739, %v738
    %v793 = vpack.c.b16 %v741, %v740
    %v794 = vpack.c.b16 %v743, %v742
    %v795 = vpack.c.b16 %v745, %v744
    %v796 = vpack.c.b16 %v747, %v746
    %v797 = vpack.c.b16 %v749, %v748
    %v798 = vpack.c.b16 %v751, %v750
    %v799 = vpack.c.b16 %v753, %v752
    %v800 = vpack.c.b16 %v755, %v754
    %v801 = vpack.c.b16 %v757, %v756
    %v802 = vpack.c.b16 %v759, %v758
    %v803 = vpack.c.b16 %v761, %v760
    %v804 = vpack.c.b16 %v763, %v762
    %v805 = vpack.c.b16 %v765, %v764
    %v806 = vpack.c.b16 %v767, %v766
    %v807 = vpack.c.b16 %v769, %v768
    %v808 = vpack.c.b16 %v771, %v770
    %v809 = vpack.c.b16 %v773, %v772
    %v810 = vpack.c.b16 %v775, %v774
    %v811 = vpack.c.b16 %v777, %v776
    %v812 = vpack.c.b16 %v779, %v778
    %v813 = vpack.c.b16 %v781, %v780
    %846 = vmatprep.subr.bf16.mxu0 0
    %847 = vmatpush1.bf16.msra.mxu0 %v782
    %848 = vmatprep.subr.bf16.mxu0 0
    %849 = vmatpush1.bf16.msra.mxu0 %v783
    %850 = vmatprep.subr.bf16.mxu0 0
    %851 = vmatpush1.bf16.msra.mxu0 %v784
    %852 = vmatprep.subr.bf16.mxu0 0
    %853 = vmatpush1.bf16.msra.mxu0 %v785
    %854 = vmatprep.subr.bf16.mxu0 0
    %855 = vmatpush1.bf16.msra.mxu0 %v786
    %856 = vmatprep.subr.bf16.mxu0 0
    %857 = vmatpush1.bf16.msra.mxu0 %v787
    %858 = vmatprep.subr.bf16.mxu0 0
    %859 = vmatpush1.bf16.msra.mxu0 %v788
    %860 = vmatprep.subr.bf16.mxu0 0
    %861 = vmatpush1.bf16.msra.mxu0 %v789
    %862 = vmatprep.subr.bf16.mxu0 0
    %863 = vmatpush1.bf16.msra.mxu0 %v790
    %864 = vmatprep.subr.bf16.mxu0 0
    %865 = vmatpush1.bf16.msra.mxu0 %v791
    %866 = vmatprep.subr.bf16.mxu0 0
    %867 = vmatpush1.bf16.msra.mxu0 %v792
    %868 = vmatprep.subr.bf16.mxu0 0
    %869 = vmatpush1.bf16.msra.mxu0 %v793
    %870 = vmatprep.subr.bf16.mxu0 0
    %871 = vmatpush1.bf16.msra.mxu0 %v794
    %872 = vmatprep.subr.bf16.mxu0 0
    %873 = vmatpush1.bf16.msra.mxu0 %v795
    %874 = vmatprep.subr.bf16.mxu0 0
    %875 = vmatpush1.bf16.msra.mxu0 %v796
    %876 = vmatprep.subr.bf16.mxu0 0
    %877 = vmatpush1.bf16.msra.mxu0 %v797
    %878 = vmatprep.mubr.bf16.mxu0 %v580
    %879 = vmatmul.mubr.bf16.gmra.mrb[0].mxu0 %v579
    %v880 = vpop.f32.mrb[0].mxu0
    %v881 = vadd.f32 %v652, %v880
    %v882 = vpop.f32.mrb[0].mxu0
    %v883 = vpop.f32.mrb[0].mxu0
    %v884 = vpop.f32.mrb[0].mxu0
    %885 = vdwg.mxu0
    %886 = vmatprep.subr.bf16.mxu0 0
    %887 = vmatpush1.bf16.msra.mxu0 %v798
    %888 = vmatprep.subr.bf16.mxu0 0
    %889 = vmatpush1.bf16.msra.mxu0 %v799
    %890 = vmatprep.subr.bf16.mxu0 0
    %891 = vmatpush1.bf16.msra.mxu0 %v800
    %892 = vmatprep.subr.bf16.mxu0 0
    %893 = vmatpush1.bf16.msra.mxu0 %v801
    %894 = vmatprep.subr.bf16.mxu0 0
    %895 = vmatpush1.bf16.msra.mxu0 %v802
    %896 = vmatprep.subr.bf16.mxu0 0
    %897 = vmatpush1.bf16.msra.mxu0 %v803
    %898 = vmatprep.subr.bf16.mxu0 0
    %899 = vmatpush1.bf16.msra.mxu0 %v804
    %900 = vmatprep.subr.bf16.mxu0 0
    %901 = vmatpush1.bf16.msra.mxu0 %v805
    %902 = vmatprep.subr.bf16.mxu0 0
    %903 = vmatpush1.bf16.msra.mxu0 %v806
    %904 = vmatprep.subr.bf16.mxu0 0
    %905 = vmatpush1.bf16.msra.mxu0 %v807
    %906 = vmatprep.subr.bf16.mxu0 0
    %907 = vmatpush1.bf16.msra.mxu0 %v808
    %908 = vmatprep.subr.bf16.mxu0 0
    %909 = vmatpush1.bf16.msra.mxu0 %v809
    %910 = vmatprep.subr.bf16.mxu0 0
    %911 = vmatpush1.bf16.msra.mxu0 %v810
    %912 = vmatprep.subr.bf16.mxu0 0
    %913 = vmatpush1.bf16.msra.mxu0 %v811
    %914 = vmatprep.subr.bf16.mxu0 0
    %915 = vmatpush1.bf16.msra.mxu0 %v812
    %916 = vmatprep.subr.bf16.mxu0 0
    %917 = vmatpush1.bf16.msra.mxu0 %v813
    %918 = vmatprep.mubr.bf16.mxu0 %v582
    %919 = vmatmul.mubr.bf16.gmra.mrb[0].mxu0 %v581
    %v920 = vpop.f32.mrb[0].mxu0
    %v921 = vadd.f32 %v881, %v920
    %v922 = vpop.f32.mrb[0].mxu0
    %v923 = vpop.f32.mrb[0].mxu0
    %v924 = vpop.f32.mrb[0].mxu0
    %925 = vdwg.mxu0
    %v926 = vmax.f32 %v921, 0.0
    %v927 = vpack.c.bf16 %v926, %v926
    %v928 = vld [vmem:[%s5] sm:$0xf]
    %v929 = vld [vmem:[%s5 + $0x4] sm:$0xf]
    %v930 = vld [vmem:[%s5 + $0x8] sm:$0xf]
    %v931 = vld [vmem:[%s5 + $0xc] sm:$0xf]
    %v932 = vld [vmem:[%s5 + $0x10] sm:$0xf]
    %v933 = vld [vmem:[%s5 + $0x14] sm:$0xf]
    %v934 = vld [vmem:[%s5 + $0x18] sm:$0xf]
    %v935 = vld [vmem:[%s5 + $0x1c] sm:$0xf]
    %v936 = vld [vmem:[%s6] sm:$0x1]
    %v938 = vlaneseq
    %v939 = vshrl.u32 %v938, 7
    %v940 = vsub.s32 0, %v939
    %v941 = vrot.slane %v936, %v940
    %v951 = vunpack.c.l.b16 %v928
    %v952 = vunpack.c.l.b16 %v929
    %v953 = vunpack.c.l.b16 %v930
    %v954 = vunpack.c.l.b16 %v931
    %v955 = vunpack.c.l.b16 %v932
    %v956 = vunpack.c.l.b16 %v933
    %v957 = vunpack.c.l.b16 %v934
    %v958 = vunpack.c.l.b16 %v935
    %v959 = vpack.c.b16 %v952, %v951
    %v960 = vpack.c.b16 %v954, %v953
    %v961 = vpack.c.b16 %v956, %v955
    %v962 = vpack.c.b16 %v958, %v957
    %vm967 = vcmask 523264
    %v969 = vsel %vm967, %v927, 0
    %971 = vmatprep.subr.bf16.mxu0 0
    %972 = vmatpush1.bf16.msra.mxu0 %v959
    %973 = vmatprep.subr.bf16.mxu0 0
    %974 = vmatpush1.bf16.msra.mxu0 %v960
    %975 = vmatprep.subr.bf16.mxu0 0
    %976 = vmatpush1.bf16.msra.mxu0 %v961
    %977 = vmatprep.subr.bf16.mxu0 0
    %978 = vmatpush1.bf16.msra.mxu0 %v962
    %979 = vmatprep.subr.bf16.mxu0 0
    %980 = vmatpush1.bf16.msra.mxu0 0
    %981 = vmatprep.subr.bf16.mxu0 0
    %982 = vmatpush1.bf16.msra.mxu0 0
    %983 = vmatprep.subr.bf16.mxu0 0
    %984 = vmatpush1.bf16.msra.mxu0 0
    %985 = vmatprep.subr.bf16.mxu0 0
    %986 = vmatpush1.bf16.msra.mxu0 0
    %987 = vmatprep.subr.bf16.mxu0 0
    %988 = vmatpush1.bf16.msra.mxu0 0
    %989 = vmatprep.subr.bf16.mxu0 0
    %990 = vmatpush1.bf16.msra.mxu0 0
    %991 = vmatprep.subr.bf16.mxu0 0
    %992 = vmatpush1.bf16.msra.mxu0 0
    %993 = vmatprep.subr.bf16.mxu0 0
    %994 = vmatpush1.bf16.msra.mxu0 0
    %995 = vmatprep.subr.bf16.mxu0 0
    %996 = vmatpush1.bf16.msra.mxu0 0
    %997 = vmatprep.subr.bf16.mxu0 0
    %998 = vmatpush1.bf16.msra.mxu0 0
    %999 = vmatprep.subr.bf16.mxu0 0
    %1000 = vmatpush1.bf16.msra.mxu0 0
    %1001 = vmatprep.subr.bf16.mxu0 0
    %1002 = vmatpush1.bf16.msra.mxu0 0
    %1003 = vmatprep.mubr.bf16.mxu0 0
    %1004 = vmatmul.mubr.bf16.gmra.mrb[0].mxu0 %v969
    %v1005 = vpop.f32.mrb[0].mxu0
    %v1006 = vadd.f32 %v941, %v1005
    %v1007 = vpop.f32.mrb[0].mxu0
    %v1008 = vpop.f32.mrb[0].mxu0
    %v1009 = vpop.f32.mrb[0].mxu0
    %1010 = vdwg.mxu0
    %v1011 = vmax.f32 %v1006, 0.0
    %v1012 = vpack.c.bf16 %v1011, %v1011
    %v1013 = vld [vmem:[%s7] sm:$0xf]
    %v1014 = vld [vmem:[%s7 + $0x4] sm:$0xf]
    %v1015 = vld [vmem:[%s8] sm:$0x1]
    %v1017 = vlaneseq
    %v1018 = vshrl.u32 %v1017, 7
    %v1019 = vsub.s32 0, %v1018
    %v1020 = vrot.slane %v1015, %v1019
    %v1024 = vunpack.c.l.b16 %v1013
    %v1025 = vunpack.c.l.b16 %v1014
    %v1026 = vpack.c.b16 %v1025, %v1024
    %vm1028 = vcmask 130048
    %v1030 = vsel %vm1028, %v1012, 0
    %1032 = vmatprep.subr.bf16.mxu0 0
    %1033 = vmatpush1.bf16.msra.mxu0 %v1026
    %1034 = vmatprep.subr.bf16.mxu0 0
    %1035 = vmatpush1.bf16.msra.mxu0 0
    %1036 = vmatprep.subr.bf16.mxu0 0
    %1037 = vmatpush1.bf16.msra.mxu0 0
    %1038 = vmatprep.subr.bf16.mxu0 0
    %1039 = vmatpush1.bf16.msra.mxu0 0
    %1040 = vmatprep.subr.bf16.mxu0 0
    %1041 = vmatpush1.bf16.msra.mxu0 0
    %1042 = vmatprep.subr.bf16.mxu0 0
    %1043 = vmatpush1.bf16.msra.mxu0 0
    %1044 = vmatprep.subr.bf16.mxu0 0
    %1045 = vmatpush1.bf16.msra.mxu0 0
    %1046 = vmatprep.subr.bf16.mxu0 0
    %1047 = vmatpush1.bf16.msra.mxu0 0
    %1048 = vmatprep.subr.bf16.mxu0 0
    %1049 = vmatpush1.bf16.msra.mxu0 0
    %1050 = vmatprep.subr.bf16.mxu0 0
    %1051 = vmatpush1.bf16.msra.mxu0 0
    %1052 = vmatprep.subr.bf16.mxu0 0
    %1053 = vmatpush1.bf16.msra.mxu0 0
    %1054 = vmatprep.subr.bf16.mxu0 0
    %1055 = vmatpush1.bf16.msra.mxu0 0
    %1056 = vmatprep.subr.bf16.mxu0 0
    %1057 = vmatpush1.bf16.msra.mxu0 0
    %1058 = vmatprep.subr.bf16.mxu0 0
    %1059 = vmatpush1.bf16.msra.mxu0 0
    %1060 = vmatprep.subr.bf16.mxu0 0
    %1061 = vmatpush1.bf16.msra.mxu0 0
    %1062 = vmatprep.subr.bf16.mxu0 0
    %1063 = vmatpush1.bf16.msra.mxu0 0
    %1064 = vmatprep.mubr.bf16.mxu0 0
    %1065 = vmatmul.mubr.bf16.gmra.mrb[0].mxu0 %v1030
    %v1066 = vpop.f32.mrb[0].mxu0
    %v1067 = vadd.f32 %v1020, %v1066
    %v1068 = vpop.f32.mrb[0].mxu0
    %v1069 = vpop.f32.mrb[0].mxu0
    %v1070 = vpop.f32.mrb[0].mxu0
    %1071 = vdwg.mxu0
    %v1072 = vmax.f32 %v1067, 0.0
    %v1073 = vpack.c.bf16 %v1072, %v1072
    %v1074 = vld [vmem:[%s9] sm:$0xff]
    %v1075 = vld [vmem:[%s9 + $0x8] sm:$0xff]
    %v1076 = vld [vmem:[%s9 + $0x10] sm:$0xff]
    %v1077 = vld [vmem:[%s9 + $0x18] sm:$0xff]
    %v1078 = vld [vmem:[%s9 + $0x20] sm:$0xff]
    %v1079 = vld [vmem:[%s9 + $0x28] sm:$0xff]
    %v1080 = vld [vmem:[%s9 + $0x30] sm:$0xff]
    %v1081 = vld [vmem:[%s9 + $0x38] sm:$0xff]
    %v1082 = vld [vmem:[%s9 + $0x40] sm:$0xff]
    %v1083 = vld [vmem:[%s9 + $0x48] sm:$0xff]
    %v1084 = vld [vmem:[%s9 + $0x50] sm:$0xff]
    %v1085 = vld [vmem:[%s9 + $0x58] sm:$0xff]
    %v1086 = vld [vmem:[%s9 + $0x60] sm:$0xff]
    %v1087 = vld [vmem:[%s9 + $0x68] sm:$0xff]
    %v1088 = vld [vmem:[%s9 + $0x70] sm:$0xff]
    %v1089 = vld [vmem:[%s9 + $0x78] sm:$0xff]
    %v1090 = vld [vmem:[%s10] sm:$0xf]
    %v1092 = vlaneseq
    %v1093 = vshrl.u32 %v1092, 7
    %v1094 = vsub.s32 0, %v1093
    %v1095 = vrot.slane %v1090, %v1094
    %v1096 = vlaneseq
    %v1097 = vshrl.u32 %v1096, 7
    %v1098 = vsub.s32 1, %v1097
    %v1099 = vrot.slane %v1090, %v1098
    %v1100 = vlaneseq
    %v1101 = vshrl.u32 %v1100, 7
    %v1102 = vsub.s32 2, %v1101
    %v1103 = vrot.slane %v1090, %v1102
    %v1104 = vlaneseq
    %v1105 = vshrl.u32 %v1104, 7
    %v1106 = vsub.s32 3, %v1105
    %v1107 = vrot.slane %v1090, %v1106
    %v1128 = vunpack.c.l.b16 %v1074
    %v1129 = vunpack.c.h.b16 %v1074
    %v1130 = vunpack.c.l.b16 %v1075
    %v1131 = vunpack.c.h.b16 %v1075
    %v1132 = vunpack.c.l.b16 %v1076
    %v1133 = vunpack.c.h.b16 %v1076
    %v1134 = vunpack.c.l.b16 %v1077
    %v1135 = vunpack.c.h.b16 %v1077
    %v1136 = vunpack.c.l.b16 %v1078
    %v1137 = vunpack.c.h.b16 %v1078
    %v1138 = vunpack.c.l.b16 %v1079
    %v1139 = vunpack.c.h.b16 %v1079
    %v1140 = vunpack.c.l.b16 %v1080
    %v1141 = vunpack.c.h.b16 %v1080
    %v1142 = vunpack.c.l.b16 %v1081
    %v1143 = vunpack.c.h.b16 %v1081
    %v1144 = vunpack.c.l.b16 %v1082
    %v1145 = vunpack.c.h.b16 %v1082
    %v1146 = vunpack.c.l.b16 %v1083
    %v1147 = vunpack.c.h.b16 %v1083
    %v1148 = vunpack.c.l.b16 %v1084
    %v1149 = vunpack.c.h.b16 %v1084
    %v1150 = vunpack.c.l.b16 %v1085
    %v1151 = vunpack.c.h.b16 %v1085
    %v1152 = vunpack.c.l.b16 %v1086
    %v1153 = vunpack.c.h.b16 %v1086
    %v1154 = vunpack.c.l.b16 %v1087
    %v1155 = vunpack.c.h.b16 %v1087
    %v1156 = vunpack.c.l.b16 %v1088
    %v1157 = vunpack.c.h.b16 %v1088
    %v1158 = vunpack.c.l.b16 %v1089
    %v1159 = vunpack.c.h.b16 %v1089
    %v1160 = vpack.c.b16 %v1132, %v1128
    %v1161 = vpack.c.b16 %v1133, %v1129
    %v1162 = vpack.c.b16 %v1134, %v1130
    %v1163 = vpack.c.b16 %v1135, %v1131
    %v1164 = vpack.c.b16 %v1140, %v1136
    %v1165 = vpack.c.b16 %v1141, %v1137
    %v1166 = vpack.c.b16 %v1142, %v1138
    %v1167 = vpack.c.b16 %v1143, %v1139
    %v1168 = vpack.c.b16 %v1148, %v1144
    %v1169 = vpack.c.b16 %v1149, %v1145
    %v1170 = vpack.c.b16 %v1150, %v1146
    %v1171 = vpack.c.b16 %v1151, %v1147
    %v1172 = vpack.c.b16 %v1156, %v1152
    %v1173 = vpack.c.b16 %v1157, %v1153
    %v1174 = vpack.c.b16 %v1158, %v1154
    %v1175 = vpack.c.b16 %v1159, %v1155
    %v1193 = vsel %vm967, %v1073, 0
    %1195 = vmatprep.subr.bf16.mxu0 %v1161
    %1196 = vmatpush1.bf16.msra.mxu0 %v1160
    %1197 = vmatprep.subr.bf16.mxu0 %v1165
    %1198 = vmatpush1.bf16.msra.mxu0 %v1164
    %1199 = vmatprep.subr.bf16.mxu0 %v1169
    %1200 = vmatpush1.bf16.msra.mxu0 %v1168
    %1201 = vmatprep.subr.bf16.mxu0 %v1173
    %1202 = vmatpush1.bf16.msra.mxu0 %v1172
    %1203 = vmatprep.subr.bf16.mxu0 0
    %1204 = vmatpush1.bf16.msra.mxu0 0
    %1205 = vmatprep.subr.bf16.mxu0 0
    %1206 = vmatpush1.bf16.msra.mxu0 0
    %1207 = vmatprep.subr.bf16.mxu0 0
    %1208 = vmatpush1.bf16.msra.mxu0 0
    %1209 = vmatprep.subr.bf16.mxu0 0
    %1210 = vmatpush1.bf16.msra.mxu0 0
    %1211 = vmatprep.subr.bf16.mxu0 0
    %1212 = vmatpush1.bf16.msra.mxu0 0
    %1213 = vmatprep.subr.bf16.mxu0 0
    %1214 = vmatpush1.bf16.msra.mxu0 0
    %1215 = vmatprep.subr.bf16.mxu0 0
    %1216 = vmatpush1.bf16.msra.mxu0 0
    %1217 = vmatprep.subr.bf16.mxu0 0
    %1218 = vmatpush1.bf16.msra.mxu0 0
    %1219 = vmatprep.subr.bf16.mxu0 0
    %1220 = vmatpush1.bf16.msra.mxu0 0
    %1221 = vmatprep.subr.bf16.mxu0 0
    %1222 = vmatpush1.bf16.msra.mxu0 0
    %1223 = vmatprep.subr.bf16.mxu0 0
    %1224 = vmatpush1.bf16.msra.mxu0 0
    %1225 = vmatprep.subr.bf16.mxu0 0
    %1226 = vmatpush1.bf16.msra.mxu0 0
    %1227 = vmatprep.mubr.bf16.mxu0 0
    %1228 = vmatmul.mubr.bf16.gmra.mrb[0].mxu0 %v1193
    %v1229 = vpop.f32.mrb[0].mxu0
    %v1230 = vadd.f32 %v1095, %v1229
    %v1231 = vpop.f32.mrb[0].mxu0
    %v1232 = vadd.f32 %v1099, %v1231
    %v1233 = vpop.f32.mrb[0].mxu0
    %v1234 = vpop.f32.mrb[0].mxu0
    %1235 = vdwg.mxu0
    %1236 = vmatprep.subr.bf16.mxu0 %v1163
    %1237 = vmatpush1.bf16.msra.mxu0 %v1162
    %1238 = vmatprep.subr.bf16.mxu0 %v1167
    %1239 = vmatpush1.bf16.msra.mxu0 %v1166
    %1240 = vmatprep.subr.bf16.mxu0 %v1171
    %1241 = vmatpush1.bf16.msra.mxu0 %v1170
    %1242 = vmatprep.subr.bf16.mxu0 %v1175
    %1243 = vmatpush1.bf16.msra.mxu0 %v1174
    %1244 = vmatprep.subr.bf16.mxu0 0
    %1245 = vmatpush1.bf16.msra.mxu0 0
    %1246 = vmatprep.subr.bf16.mxu0 0
    %1247 = vmatpush1.bf16.msra.mxu0 0
    %1248 = vmatprep.subr.bf16.mxu0 0
    %1249 = vmatpush1.bf16.msra.mxu0 0
    %1250 = vmatprep.subr.bf16.mxu0 0
    %1251 = vmatpush1.bf16.msra.mxu0 0
    %1252 = vmatprep.subr.bf16.mxu0 0
    %1253 = vmatpush1.bf16.msra.mxu0 0
    %1254 = vmatprep.subr.bf16.mxu0 0
    %1255 = vmatpush1.bf16.msra.mxu0 0
    %1256 = vmatprep.subr.bf16.mxu0 0
    %1257 = vmatpush1.bf16.msra.mxu0 0
    %1258 = vmatprep.subr.bf16.mxu0 0
    %1259 = vmatpush1.bf16.msra.mxu0 0
    %1260 = vmatprep.subr.bf16.mxu0 0
    %1261 = vmatpush1.bf16.msra.mxu0 0
    %1262 = vmatprep.subr.bf16.mxu0 0
    %1263 = vmatpush1.bf16.msra.mxu0 0
    %1264 = vmatprep.subr.bf16.mxu0 0
    %1265 = vmatpush1.bf16.msra.mxu0 0
    %1266 = vmatprep.subr.bf16.mxu0 0
    %1267 = vmatpush1.bf16.msra.mxu0 0
    %1268 = vmatprep.mubr.bf16.mxu0 0
    %1269 = vmatmul.mubr.bf16.gmra.mrb[0].mxu0 %v1193
    %v1270 = vpop.f32.mrb[0].mxu0
    %v1271 = vadd.f32 %v1103, %v1270
    %v1272 = vpop.f32.mrb[0].mxu0
    %v1273 = vadd.f32 %v1107, %v1272
    %v1274 = vpop.f32.mrb[0].mxu0
    %v1275 = vpop.f32.mrb[0].mxu0
    %1276 = vdwg.mxu0
    %v1277 = vmax.f32 %v1230, 0.0
    %v1278 = vmax.f32 %v1232, 0.0
    %v1279 = vmax.f32 %v1271, 0.0
    %v1280 = vmax.f32 %v1273, 0.0
    %v1281 = vpack.c.bf16 %v1277, %v1277
    %v1282 = vpack.c.bf16 %v1278, %v1278
    %v1283 = vpack.c.bf16 %v1279, %v1279
    %v1284 = vpack.c.bf16 %v1280, %v1280
    %v1285 = vld [vmem:[#allocation4] sm:$0xff]
    %v1286 = vld [vmem:[#allocation4 + $0x8] sm:$0xff]
    %v1287 = vld [vmem:[#allocation4 + $0x10] sm:$0xff]
    %v1288 = vld [vmem:[#allocation4 + $0x18] sm:$0xff]
    %v1289 = vld [vmem:[#allocation4 + $0x20] sm:$0xff]
    %v1290 = vld [vmem:[#allocation4 + $0x28] sm:$0xff]
    %v1291 = vld [vmem:[#allocation4 + $0x30] sm:$0xff]
    %v1292 = vld [vmem:[#allocation4 + $0x38] sm:$0xff]
    %v1293 = vld [vmem:[#allocation4 + $0x40] sm:$0xff]
    %v1294 = vld [vmem:[#allocation4 + $0x48] sm:$0xff]
    %v1295 = vld [vmem:[#allocation4 + $0x50] sm:$0xff]
    %v1296 = vld [vmem:[#allocation4 + $0x58] sm:$0xff]
    %v1297 = vld [vmem:[#allocation4 + $0x60] sm:$0xff]
    %v1298 = vld [vmem:[#allocation4 + $0x68] sm:$0xff]
    %v1299 = vld [vmem:[#allocation4 + $0x70] sm:$0xff]
    %v1300 = vld [vmem:[#allocation4 + $0x78] sm:$0xff]
    %v1301 = vld [vmem:[#allocation4 + $0x80] sm:$0xff]
    %v1302 = vld [vmem:[#allocation4 + $0x88] sm:$0xff]
    %v1303 = vld [vmem:[#allocation4 + $0x90] sm:$0xff]
    %v1304 = vld [vmem:[#allocation4 + $0x98] sm:$0xff]
    %v1305 = vld [vmem:[#allocation4 + $0xa0] sm:$0xff]
    %v1306 = vld [vmem:[#allocation4 + $0xa8] sm:$0xff]
    %v1307 = vld [vmem:[#allocation4 + $0xb0] sm:$0xff]
    %v1308 = vld [vmem:[#allocation4 + $0xb8] sm:$0xff]
    %v1309 = vld [vmem:[#allocation4 + $0xc0] sm:$0xff]
    %v1310 = vld [vmem:[#allocation4 + $0xc8] sm:$0xff]
    %v1311 = vld [vmem:[#allocation4 + $0xd0] sm:$0xff]
    %v1312 = vld [vmem:[#allocation4 + $0xd8] sm:$0xff]
    %v1313 = vld [vmem:[#allocation4 + $0xe0] sm:$0xff]
    %v1314 = vld [vmem:[#allocation4 + $0xe8] sm:$0xff]
    %v1315 = vld [vmem:[#allocation4 + $0xf0] sm:$0xff]
    %v1316 = vld [vmem:[#allocation4 + $0xf8] sm:$0xff]
    %v1317 = vld [vmem:[#allocation4 + $0x100] sm:$0xff]
    %v1318 = vld [vmem:[#allocation4 + $0x108] sm:$0xff]
    %v1319 = vld [vmem:[#allocation4 + $0x110] sm:$0xff]
    %v1320 = vld [vmem:[#allocation4 + $0x118] sm:$0xff]
    %v1321 = vld [vmem:[#allocation4 + $0x120] sm:$0xff]
    %v1322 = vld [vmem:[#allocation4 + $0x128] sm:$0xff]
    %v1323 = vld [vmem:[#allocation4 + $0x130] sm:$0xff]
    %v1324 = vld [vmem:[#allocation4 + $0x138] sm:$0xff]
    %v1325 = vld [vmem:[#allocation4 + $0x140] sm:$0xff]
    %v1326 = vld [vmem:[#allocation4 + $0x148] sm:$0xff]
    %v1327 = vld [vmem:[#allocation4 + $0x150] sm:$0xff]
    %v1328 = vld [vmem:[#allocation4 + $0x158] sm:$0xff]
    %v1329 = vld [vmem:[#allocation4 + $0x160] sm:$0xff]
    %v1330 = vld [vmem:[#allocation4 + $0x168] sm:$0xff]
    %v1331 = vld [vmem:[#allocation4 + $0x170] sm:$0xff]
    %v1332 = vld [vmem:[#allocation4 + $0x178] sm:$0xff]
    %v1333 = vld [vmem:[#allocation4 + $0x180] sm:$0xff]
    %v1334 = vld [vmem:[#allocation4 + $0x188] sm:$0xff]
    %v1335 = vld [vmem:[#allocation4 + $0x190] sm:$0xff]
    %v1336 = vld [vmem:[#allocation4 + $0x198] sm:$0xff]
    %v1337 = vld [vmem:[#allocation4 + $0x1a0] sm:$0xff]
    %v1338 = vld [vmem:[#allocation4 + $0x1a8] sm:$0xff]
    %v1339 = vld [vmem:[#allocation4 + $0x1b0] sm:$0xff]
    %v1340 = vld [vmem:[#allocation4 + $0x1b8] sm:$0xff]
    %v1341 = vld [vmem:[#allocation4 + $0x1c0] sm:$0xff]
    %v1342 = vld [vmem:[#allocation4 + $0x1c8] sm:$0xff]
    %v1343 = vld [vmem:[#allocation4 + $0x1d0] sm:$0xff]
    %v1344 = vld [vmem:[#allocation4 + $0x1d8] sm:$0xff]
    %v1345 = vld [vmem:[#allocation4 + $0x1e0] sm:$0xff]
    %v1346 = vld [vmem:[#allocation4 + $0x1e8] sm:$0xff]
    %v1347 = vld [vmem:[#allocation4 + $0x1f0] sm:$0xff]
    %v1348 = vld [vmem:[#allocation4 + $0x1f8] sm:$0xff]
    %v1349 = vld [vmem:[%s12] sm:$0x3]
    %v1351 = vlaneseq
    %v1352 = vshrl.u32 %v1351, 7
    %v1353 = vsub.s32 0, %v1352
    %v1354 = vrot.slane %v1349, %v1353
    %v1355 = vlaneseq
    %v1356 = vshrl.u32 %v1355, 7
    %v1357 = vsub.s32 1, %v1356
    %v1358 = vrot.slane %v1349, %v1357
    %v1425 = vunpack.c.l.b16 %v1285
    %v1426 = vunpack.c.h.b16 %v1285
    %v1427 = vunpack.c.l.b16 %v1286
    %v1428 = vunpack.c.h.b16 %v1286
    %v1429 = vunpack.c.l.b16 %v1287
    %v1430 = vunpack.c.h.b16 %v1287
    %v1431 = vunpack.c.l.b16 %v1288
    %v1432 = vunpack.c.h.b16 %v1288
    %v1433 = vunpack.c.l.b16 %v1289
    %v1434 = vunpack.c.h.b16 %v1289
    %v1435 = vunpack.c.l.b16 %v1290
    %v1436 = vunpack.c.h.b16 %v1290
    %v1437 = vunpack.c.l.b16 %v1291
    %v1438 = vunpack.c.h.b16 %v1291
    %v1439 = vunpack.c.l.b16 %v1292
    %v1440 = vunpack.c.h.b16 %v1292
    %v1441 = vunpack.c.l.b16 %v1293
    %v1442 = vunpack.c.h.b16 %v1293
    %v1443 = vunpack.c.l.b16 %v1294
    %v1444 = vunpack.c.h.b16 %v1294
    %v1445 = vunpack.c.l.b16 %v1295
    %v1446 = vunpack.c.h.b16 %v1295
    %v1447 = vunpack.c.l.b16 %v1296
    %v1448 = vunpack.c.h.b16 %v1296
    %v1449 = vunpack.c.l.b16 %v1297
    %v1450 = vunpack.c.h.b16 %v1297
    %v1451 = vunpack.c.l.b16 %v1298
    %v1452 = vunpack.c.h.b16 %v1298
    %v1453 = vunpack.c.l.b16 %v1299
    %v1454 = vunpack.c.h.b16 %v1299
    %v1455 = vunpack.c.l.b16 %v1300
    %v1456 = vunpack.c.h.b16 %v1300
    %v1457 = vunpack.c.l.b16 %v1301
    %v1458 = vunpack.c.h.b16 %v1301
    %v1459 = vunpack.c.l.b16 %v1302
    %v1460 = vunpack.c.h.b16 %v1302
    %v1461 = vunpack.c.l.b16 %v1303
    %v1462 = vunpack.c.h.b16 %v1303
    %v1463 = vunpack.c.l.b16 %v1304
    %v1464 = vunpack.c.h.b16 %v1304
    %v1465 = vunpack.c.l.b16 %v1305
    %v1466 = vunpack.c.h.b16 %v1305
    %v1467 = vunpack.c.l.b16 %v1306
    %v1468 = vunpack.c.h.b16 %v1306
    %v1469 = vunpack.c.l.b16 %v1307
    %v1470 = vunpack.c.h.b16 %v1307
    %v1471 = vunpack.c.l.b16 %v1308
    %v1472 = vunpack.c.h.b16 %v1308
    %v1473 = vunpack.c.l.b16 %v1309
    %v1474 = vunpack.c.h.b16 %v1309
    %v1475 = vunpack.c.l.b16 %v1310
    %v1476 = vunpack.c.h.b16 %v1310
    %v1477 = vunpack.c.l.b16 %v1311
    %v1478 = vunpack.c.h.b16 %v1311
    %v1479 = vunpack.c.l.b16 %v1312
    %v1480 = vunpack.c.h.b16 %v1312
    %v1481 = vunpack.c.l.b16 %v1313
    %v1482 = vunpack.c.h.b16 %v1313
    %v1483 = vunpack.c.l.b16 %v1314
    %v1484 = vunpack.c.h.b16 %v1314
    %v1485 = vunpack.c.l.b16 %v1315
    %v1486 = vunpack.c.h.b16 %v1315
    %v1487 = vunpack.c.l.b16 %v1316
    %v1488 = vunpack.c.h.b16 %v1316
    %v1489 = vunpack.c.l.b16 %v1317
    %v1490 = vunpack.c.h.b16 %v1317
    %v1491 = vunpack.c.l.b16 %v1318
    %v1492 = vunpack.c.h.b16 %v1318
    %v1493 = vunpack.c.l.b16 %v1319
    %v1494 = vunpack.c.h.b16 %v1319
    %v1495 = vunpack.c.l.b16 %v1320
    %v1496 = vunpack.c.h.b16 %v1320
    %v1497 = vunpack.c.l.b16 %v1321
    %v1498 = vunpack.c.h.b16 %v1321
    %v1499 = vunpack.c.l.b16 %v1322
    %v1500 = vunpack.c.h.b16 %v1322
    %v1501 = vunpack.c.l.b16 %v1323
    %v1502 = vunpack.c.h.b16 %v1323
    %v1503 = vunpack.c.l.b16 %v1324
    %v1504 = vunpack.c.h.b16 %v1324
    %v1505 = vunpack.c.l.b16 %v1325
    %v1506 = vunpack.c.h.b16 %v1325
    %v1507 = vunpack.c.l.b16 %v1326
    %v1508 = vunpack.c.h.b16 %v1326
    %v1509 = vunpack.c.l.b16 %v1327
    %v1510 = vunpack.c.h.b16 %v1327
    %v1511 = vunpack.c.l.b16 %v1328
    %v1512 = vunpack.c.h.b16 %v1328
    %v1513 = vunpack.c.l.b16 %v1329
    %v1514 = vunpack.c.h.b16 %v1329
    %v1515 = vunpack.c.l.b16 %v1330
    %v1516 = vunpack.c.h.b16 %v1330
    %v1517 = vunpack.c.l.b16 %v1331
    %v1518 = vunpack.c.h.b16 %v1331
    %v1519 = vunpack.c.l.b16 %v1332
    %v1520 = vunpack.c.h.b16 %v1332
    %v1521 = vunpack.c.l.b16 %v1333
    %v1522 = vunpack.c.h.b16 %v1333
    %v1523 = vunpack.c.l.b16 %v1334
    %v1524 = vunpack.c.h.b16 %v1334
    %v1525 = vunpack.c.l.b16 %v1335
    %v1526 = vunpack.c.h.b16 %v1335
    %v1527 = vunpack.c.l.b16 %v1336
    %v1528 = vunpack.c.h.b16 %v1336
    %v1529 = vunpack.c.l.b16 %v1337
    %v1530 = vunpack.c.h.b16 %v1337
    %v1531 = vunpack.c.l.b16 %v1338
    %v1532 = vunpack.c.h.b16 %v1338
    %v1533 = vunpack.c.l.b16 %v1339
    %v1534 = vunpack.c.h.b16 %v1339
    %v1535 = vunpack.c.l.b16 %v1340
    %v1536 = vunpack.c.h.b16 %v1340
    %v1537 = vunpack.c.l.b16 %v1341
    %v1538 = vunpack.c.h.b16 %v1341
    %v1539 = vunpack.c.l.b16 %v1342
    %v1540 = vunpack.c.h.b16 %v1342
    %v1541 = vunpack.c.l.b16 %v1343
    %v1542 = vunpack.c.h.b16 %v1343
    %v1543 = vunpack.c.l.b16 %v1344
    %v1544 = vunpack.c.h.b16 %v1344
    %v1545 = vunpack.c.l.b16 %v1345
    %v1546 = vunpack.c.h.b16 %v1345
    %v1547 = vunpack.c.l.b16 %v1346
    %v1548 = vunpack.c.h.b16 %v1346
    %v1549 = vunpack.c.l.b16 %v1347
    %v1550 = vunpack.c.h.b16 %v1347
    %v1551 = vunpack.c.l.b16 %v1348
    %v1552 = vunpack.c.h.b16 %v1348
    %v1553 = vpack.c.b16 %v1427, %v1425
    %v1554 = vpack.c.b16 %v1428, %v1426
    %v1555 = vpack.c.b16 %v1431, %v1429
    %v1556 = vpack.c.b16 %v1432, %v1430
    %v1557 = vpack.c.b16 %v1435, %v1433
    %v1558 = vpack.c.b16 %v1436, %v1434
    %v1559 = vpack.c.b16 %v1439, %v1437
    %v1560 = vpack.c.b16 %v1440, %v1438
    %v1561 = vpack.c.b16 %v1443, %v1441
    %v1562 = vpack.c.b16 %v1444, %v1442
    %v1563 = vpack.c.b16 %v1447, %v1445
    %v1564 = vpack.c.b16 %v1448, %v1446
    %v1565 = vpack.c.b16 %v1451, %v1449
    %v1566 = vpack.c.b16 %v1452, %v1450
    %v1567 = vpack.c.b16 %v1455, %v1453
    %v1568 = vpack.c.b16 %v1456, %v1454
    %v1569 = vpack.c.b16 %v1459, %v1457
    %v1570 = vpack.c.b16 %v1460, %v1458
    %v1571 = vpack.c.b16 %v1463, %v1461
    %v1572 = vpack.c.b16 %v1464, %v1462
    %v1573 = vpack.c.b16 %v1467, %v1465
    %v1574 = vpack.c.b16 %v1468, %v1466
    %v1575 = vpack.c.b16 %v1471, %v1469
    %v1576 = vpack.c.b16 %v1472, %v1470
    %v1577 = vpack.c.b16 %v1475, %v1473
    %v1578 = vpack.c.b16 %v1476, %v1474
    %v1579 = vpack.c.b16 %v1479, %v1477
    %v1580 = vpack.c.b16 %v1480, %v1478
    %v1581 = vpack.c.b16 %v1483, %v1481
    %v1582 = vpack.c.b16 %v1484, %v1482
    %v1583 = vpack.c.b16 %v1487, %v1485
    %v1584 = vpack.c.b16 %v1488, %v1486
    %v1585 = vpack.c.b16 %v1491, %v1489
    %v1586 = vpack.c.b16 %v1492, %v1490
    %v1587 = vpack.c.b16 %v1495, %v1493
    %v1588 = vpack.c.b16 %v1496, %v1494
    %v1589 = vpack.c.b16 %v1499, %v1497
    %v1590 = vpack.c.b16 %v1500, %v1498
    %v1591 = vpack.c.b16 %v1503, %v1501
    %v1592 = vpack.c.b16 %v1504, %v1502
    %v1593 = vpack.c.b16 %v1507, %v1505
    %v1594 = vpack.c.b16 %v1508, %v1506
    %v1595 = vpack.c.b16 %v1511, %v1509
    %v1596 = vpack.c.b16 %v1512, %v1510
    %v1597 = vpack.c.b16 %v1515, %v1513
    %v1598 = vpack.c.b16 %v1516, %v1514
    %v1599 = vpack.c.b16 %v1519, %v1517
    %v1600 = vpack.c.b16 %v1520, %v1518
    %v1601 = vpack.c.b16 %v1523, %v1521
    %v1602 = vpack.c.b16 %v1524, %v1522
    %v1603 = vpack.c.b16 %v1527, %v1525
    %v1604 = vpack.c.b16 %v1528, %v1526
    %v1605 = vpack.c.b16 %v1531, %v1529
    %v1606 = vpack.c.b16 %v1532, %v1530
    %v1607 = vpack.c.b16 %v1535, %v1533
    %v1608 = vpack.c.b16 %v1536, %v1534
    %v1609 = vpack.c.b16 %v1539, %v1537
    %v1610 = vpack.c.b16 %v1540, %v1538
    %v1611 = vpack.c.b16 %v1543, %v1541
    %v1612 = vpack.c.b16 %v1544, %v1542
    %v1613 = vpack.c.b16 %v1547, %v1545
    %v1614 = vpack.c.b16 %v1548, %v1546
    %v1615 = vpack.c.b16 %v1551, %v1549
    %v1616 = vpack.c.b16 %v1552, %v1550
    %1681 = vmatprep.subr.bf16.mxu0 %v1554
    %1682 = vmatpush1.bf16.msra.mxu0 %v1553
    %1683 = vmatprep.subr.bf16.mxu0 %v1556
    %1684 = vmatpush1.bf16.msra.mxu0 %v1555
    %1685 = vmatprep.subr.bf16.mxu0 %v1558
    %1686 = vmatpush1.bf16.msra.mxu0 %v1557
    %1687 = vmatprep.subr.bf16.mxu0 %v1560
    %1688 = vmatpush1.bf16.msra.mxu0 %v1559
    %1689 = vmatprep.subr.bf16.mxu0 %v1562
    %1690 = vmatpush1.bf16.msra.mxu0 %v1561
    %1691 = vmatprep.subr.bf16.mxu0 %v1564
    %1692 = vmatpush1.bf16.msra.mxu0 %v1563
    %1693 = vmatprep.subr.bf16.mxu0 %v1566
    %1694 = vmatpush1.bf16.msra.mxu0 %v1565
    %1695 = vmatprep.subr.bf16.mxu0 %v1568
    %1696 = vmatpush1.bf16.msra.mxu0 %v1567
    %1697 = vmatprep.subr.bf16.mxu0 %v1570
    %1698 = vmatpush1.bf16.msra.mxu0 %v1569
    %1699 = vmatprep.subr.bf16.mxu0 %v1572
    %1700 = vmatpush1.bf16.msra.mxu0 %v1571
    %1701 = vmatprep.subr.bf16.mxu0 %v1574
    %1702 = vmatpush1.bf16.msra.mxu0 %v1573
    %1703 = vmatprep.subr.bf16.mxu0 %v1576
    %1704 = vmatpush1.bf16.msra.mxu0 %v1575
    %1705 = vmatprep.subr.bf16.mxu0 %v1578
    %1706 = vmatpush1.bf16.msra.mxu0 %v1577
    %1707 = vmatprep.subr.bf16.mxu0 %v1580
    %1708 = vmatpush1.bf16.msra.mxu0 %v1579
    %1709 = vmatprep.subr.bf16.mxu0 %v1582
    %1710 = vmatpush1.bf16.msra.mxu0 %v1581
    %1711 = vmatprep.subr.bf16.mxu0 %v1584
    %1712 = vmatpush1.bf16.msra.mxu0 %v1583
    %1713 = vmatprep.mubr.bf16.mxu0 %v1282
    %1714 = vmatmul.mubr.bf16.gmra.mrb[0].mxu0 %v1281
    %v1715 = vpop.f32.mrb[0].mxu0
    %v1716 = vadd.f32 %v1354, %v1715
    %v1717 = vpop.f32.mrb[0].mxu0
    %v1718 = vadd.f32 %v1358, %v1717
    %v1719 = vpop.f32.mrb[0].mxu0
    %v1720 = vpop.f32.mrb[0].mxu0
    %1721 = vdwg.mxu0
    %1722 = vmatprep.subr.bf16.mxu0 %v1586
    %1723 = vmatpush1.bf16.msra.mxu0 %v1585
    %1724 = vmatprep.subr.bf16.mxu0 %v1588
    %1725 = vmatpush1.bf16.msra.mxu0 %v1587
    %1726 = vmatprep.subr.bf16.mxu0 %v1590
    %1727 = vmatpush1.bf16.msra.mxu0 %v1589
    %1728 = vmatprep.subr.bf16.mxu0 %v1592
    %1729 = vmatpush1.bf16.msra.mxu0 %v1591
    %1730 = vmatprep.subr.bf16.mxu0 %v1594
    %1731 = vmatpush1.bf16.msra.mxu0 %v1593
    %1732 = vmatprep.subr.bf16.mxu0 %v1596
    %1733 = vmatpush1.bf16.msra.mxu0 %v1595
    %1734 = vmatprep.subr.bf16.mxu0 %v1598
    %1735 = vmatpush1.bf16.msra.mxu0 %v1597
    %1736 = vmatprep.subr.bf16.mxu0 %v1600
    %1737 = vmatpush1.bf16.msra.mxu0 %v1599
    %1738 = vmatprep.subr.bf16.mxu0 %v1602
    %1739 = vmatpush1.bf16.msra.mxu0 %v1601
    %1740 = vmatprep.subr.bf16.mxu0 %v1604
    %1741 = vmatpush1.bf16.msra.mxu0 %v1603
    %1742 = vmatprep.subr.bf16.mxu0 %v1606
    %1743 = vmatpush1.bf16.msra.mxu0 %v1605
    %1744 = vmatprep.subr.bf16.mxu0 %v1608
    %1745 = vmatpush1.bf16.msra.mxu0 %v1607
    %1746 = vmatprep.subr.bf16.mxu0 %v1610
    %1747 = vmatpush1.bf16.msra.mxu0 %v1609
    %1748 = vmatprep.subr.bf16.mxu0 %v1612
    %1749 = vmatpush1.bf16.msra.mxu0 %v1611
    %1750 = vmatprep.subr.bf16.mxu0 %v1614
    %1751 = vmatpush1.bf16.msra.mxu0 %v1613
    %1752 = vmatprep.subr.bf16.mxu0 %v1616
    %1753 = vmatpush1.bf16.msra.mxu0 %v1615
    %1754 = vmatprep.mubr.bf16.mxu0 %v1284
    %1755 = vmatmul.mubr.bf16.gmra.mrb[0].mxu0 %v1283
    %v1756 = vpop.f32.mrb[0].mxu0
    %v1757 = vadd.f32 %v1716, %v1756
    %v1758 = vpop.f32.mrb[0].mxu0
    %v1759 = vadd.f32 %v1718, %v1758
    %v1760 = vpop.f32.mrb[0].mxu0
    %v1761 = vpop.f32.mrb[0].mxu0
    %1762 = vdwg.mxu0
    %v1763 = vsub.f32 0.0, %v1757
    %v1764 = vsub.f32 0.0, %v1759
    %v1765 = vmul.f32 %v1763, 1.442695
    %v1766 = vpow.pop %v1765
    %v1767 = vmul.f32 %v1764, 1.442695
    %v1768 = vpow.pop %v1767
    %v1769 = vadd.f32 %v1766, 1.0
    %v1770 = vadd.f32 %v1768, 1.0
    %v1771 = vrcp.pop %v1769
    %v1772 = vrcp.pop %v1770
    %v1775 = vcombine.low %v1771, %v1772
    %v1777 = vunpack.c.l.s4 1983009808
    %v1778 = vunpack.c.0.s8 %v1777
    %v1779 = vlaneseq
    %v1780 = vshrl.u32 %v1779, 7
    %v1781 = vsub.s32 %v1778, %v1780
    %v1782 = vrot.slane %v1775, %v1781
    %1784 = vst [vmem:[%s13] sm:$0xf] %v1782
    // Predicated region
    $region62: #{fused_forward.1} parent=1 // pred_check
      _
    $region63: #{fused_forward.1} parent=1 // pred_check_branch
      %1786 = sbr.rel (0) target = $region65
    $region64: #{fused_forward.1} parent=1 // pred_region
      _
    $region65: #{fused_forward.1} parent=1 // pred_fallthru
      _
    // Predicated region
    $region66: #{fused_forward.1} parent=1 // pred_check
      _
    $region67: #{fused_forward.1} parent=1 // pred_check_branch
      %1788 = sbr.rel (0) target = $region69
    $region68: #{fused_forward.1} parent=1 // pred_region
      _
    $region69: #{fused_forward.1} parent=1 // pred_fallthru
      _
    %1789 = vsyncpa [#allocation3], 1
    %1790 = vsyncpa [#allocation5], 1

</llo_original>
